<compile_context>
chip_gen: v7x
topology: tpu7x:2x2x1
jax: 0.10.0
libtpu: 0.0.40
codegen_flags: <defaults>
</compile_context>

<pallas_src>
import jax
import jax.numpy as jnp
from jax.experimental import pallas as pl
from jax.experimental.pallas import tpu as pltpu

EPS = 1e-15


# ----------------------------------------------------------------------------
# Forward kernel: one pre-packed encoder matmul per node tile + per-tile
# lane-dense partial sums for the summary readout. No cross-step state ->
# grid axis is "parallel".
# ----------------------------------------------------------------------------
def _dgi_forward_kernel(x2_ref, w2_ref, b2_ref, alpha_ref, zz_ref, part_ref):
    a = alpha_ref[0, 0]                    # PReLU slope (scalar, SMEM)

    # (tile_n, 2F) @ (2F, 2H) with block-diag W2 == [x@W | x_cor@W] directly.
    h = jnp.dot(x2_ref[...], w2_ref[...],
                preferred_element_type=jnp.float32) + b2_ref[...]
    h = jnp.where(h >= 0, h, a * h)        # PReLU

    # Lane-dense fused output slab: (tile_n, 2H) = [pos | neg].
    zz_ref[...] = h.astype(zz_ref.dtype)

    # Per-tile partial column sums over the full 2H=128 lanes (lane-dense
    # store). Lanes [0,H) are the pos sums used by summary; lanes [H,2H) are
    # free riders. Written into row 0 of an (8, 2H) block (rows 1..7 zero) so
    # each grid step owns a disjoint, (8,128)-aligned block.
    part = jnp.sum(h, axis=0, keepdims=True)                       # (1, 2H)
    rows = jax.lax.broadcasted_iota(jnp.int32, part_ref.shape, 0)  # (8, 2H)
    part_ref[...] = jnp.where(rows == 0, part, 0.0).astype(part_ref.dtype)


def dgi_forward_fused(x, x_cor, w_enc, b_enc, alpha, *, tile_n=1024):
    """Returns (zz [N, 2H] = [pos_z | neg_z], summary [H])."""
    N, F = x.shape
    H = w_enc.shape[1]
    tile_n = min(tile_n, N)
    assert N % tile_n == 0 and tile_n % 8 == 0, \
        "N must be a multiple of tile_n (pad the graph for ragged sizes)"
    num_tiles = N // tile_n

    # Wrapper-side packing (one-time XLA ops, replaces per-step VMEM concats):
    x2 = jnp.concatenate([x, x_cor], axis=1)                       # (N, 2F)
    zeros_fh = jnp.zeros((F, H), jnp.float32)
    w2 = jnp.block([[w_enc, zeros_fh], [zeros_fh, w_enc]])         # (2F, 2H)
    b2 = jnp.concatenate([b_enc, b_enc], axis=1)                   # (1, 2H)

    zz, partials = pl.pallas_call(
        _dgi_forward_kernel,
        out_shape=(
            jax.ShapeDtypeStruct((N, 2 * H), jnp.float32),           # [pos | neg]
            jax.ShapeDtypeStruct((8 * num_tiles, 2 * H), jnp.float32),  # partial sums
        ),
        grid_spec=pltpu.PrefetchScalarGridSpec(
            num_scalar_prefetch=0,
            grid=(num_tiles,),
            in_specs=[
                pl.BlockSpec((tile_n, 2 * F), lambda i: (i, 0)),     # packed [x|x_cor] tile
                pl.BlockSpec((2 * F, 2 * H), lambda i: (0, 0)),      # block-diag weight (resident)
                pl.BlockSpec((1, 2 * H), lambda i: (0, 0)),          # packed bias (resident)
                pl.BlockSpec(memory_space=pltpu.MemorySpace.SMEM),   # PReLU alpha (1,1)
            ],
            out_specs=[
                pl.BlockSpec((tile_n, 2 * H), lambda i: (i, 0)),     # fused pos|neg slab
                pl.BlockSpec((8, 2 * H), lambda i: (i, 0)),          # per-tile partial sums
            ],
        ),
        compiler_params=pltpu.CompilerParams(
            dimension_semantics=("parallel",),        # disjoint blocks -> megacore OK (v7x)
            vmem_limit_bytes=32 * 1024 * 1024,        # safe on v5e/v6e/v7x at these tiles
        ),
    )(x2, w2, b2, alpha)

    # Tiny epilogue: finish mean + sigmoid over the pos half of the partials.
    summary = jax.nn.sigmoid(partials.sum(axis=0)[:H] / N)
    return zz, summary


def dgi_forward(x, x_cor, w_enc, b_enc, alpha, *, tile_n=1024):
    """Module-parity API: returns (pos_z [N,H], neg_z [N,H], summary [H]).

    Only use this when the caller actually needs separate pos/neg arrays;
    the loss path should consume the fused zz slab directly.
    """
    H = w_enc.shape[1]
    zz, summary = dgi_forward_fused(x, x_cor, w_enc, b_enc, alpha, tile_n=tile_n)
    return zz[:, :H], zz[:, H:], summary


# ----------------------------------------------------------------------------
# Standalone discriminator kernel: sigmoid( z @ (W @ summary) )
# (module.discriminate). W @ summary (O(H^2)) precomputed once in the wrapper;
# the kernel does one lane-dense (1,H) x (tile_n,H)^T contraction per tile.
# ----------------------------------------------------------------------------
def _discriminate_kernel(ws_ref, z_ref, out_ref):
    val = jax.lax.dot_general(
        ws_ref[...], z_ref[...],
        dimension_numbers=(((1,), (1,)), ((), ())),
        preferred_element_type=jnp.float32)              # (rows, tile_n)
    out_ref[...] = jax.nn.sigmoid(val).astype(out_ref.dtype)


def discriminate(z, weight, summary, *, tile_n=1024):
    """z: [N,H], weight: [H,H], summary: [H] -> sigmoid scores [N]."""
    N, H = z.shape
    tile_n = min(tile_n, N)
    assert N % tile_n == 0
    ws = (weight @ summary.reshape(H)).reshape(1, H)     # precompute W @ s once (JAX)

    out = pl.pallas_call(
        _discriminate_kernel,
        out_shape=jax.ShapeDtypeStruct((1, N), jnp.float32),
        grid_spec=pltpu.PrefetchScalarGridSpec(
            num_scalar_prefetch=0,
            grid=(N // tile_n,),
            in_specs=[
                pl.BlockSpec((1, H), lambda i: (0, 0)),            # W@s row (resident)
                pl.BlockSpec((tile_n, H), lambda i: (i, 0)),       # z tile
            ],
            out_specs=pl.BlockSpec((1, tile_n), lambda i: (0, i)),  # lane-dense score row
        ),
        compiler_params=pltpu.CompilerParams(
            dimension_semantics=("parallel",),
            vmem_limit_bytes=32 * 1024 * 1024,
        ),
    )(ws, z)
    return out.reshape(N)


# ----------------------------------------------------------------------------
# Fused loss-path discriminator: reads the zz = [pos|neg] slab ONCE and emits
# both score rows per tile via a (2, 2H) contraction against the 2H lanes.
# ----------------------------------------------------------------------------
def discriminate_fused(zz, weight, summary, *, tile_n=1024):
    """zz: [N, 2H] = [pos|neg] -> scores [2, N] (row 0 pos, row 1 neg)."""
    N, H2 = zz.shape
    H = H2 // 2
    tile_n = min(tile_n, N)
    assert N % tile_n == 0
    ws = weight @ summary.reshape(H)                     # (H,)
    zH = jnp.zeros((H,), jnp.float32)
    ws2 = jnp.stack([jnp.concatenate([ws, zH]),          # row 0 hits pos lanes
                     jnp.concatenate([zH, ws])], axis=0)  # row 1 hits neg lanes

    out = pl.pallas_call(
        _discriminate_kernel,
        out_shape=jax.ShapeDtypeStruct((2, N), jnp.float32),
        grid_spec=pltpu.PrefetchScalarGridSpec(
            num_scalar_prefetch=0,
            grid=(N // tile_n,),
            in_specs=[
                pl.BlockSpec((2, 2 * H), lambda i: (0, 0)),         # packed W@s rows (resident)
                pl.BlockSpec((tile_n, 2 * H), lambda i: (i, 0)),    # zz tile (read once)
            ],
            out_specs=pl.BlockSpec((2, tile_n), lambda i: (0, i)),  # lane-dense score rows
        ),
        compiler_params=pltpu.CompilerParams(
            dimension_semantics=("parallel",),
            vmem_limit_bytes=32 * 1024 * 1024,
        ),
    )(ws2, zz)
    return out


def dgi_loss(zz, weight, summary, *, tile_n=1024):
    """Mutual-information maximization objective (module.loss).

    Consumes the fused [pos|neg] slab so pos/neg are never re-materialized.
    """
    scores = discriminate_fused(zz, weight, summary, tile_n=tile_n)   # (2, N)
    pos_loss = -jnp.log(scores[0] + EPS).mean()
    neg_loss = -jnp.log(1.0 - scores[1] + EPS).mean()
    return pos_loss + neg_loss


# TODO(synk): module.test() (sklearn LogisticRegression probe) is host-side
# evaluation code with no Pallas equivalent; not translated.


# ----------------------------------------------------------------------------
# Pure-JAX reference for correctness check
# ----------------------------------------------------------------------------
def _forward_ref(x, x_cor, w_enc, b_enc, alpha):
    def enc(v):
        h = v @ w_enc + b_enc
        return jnp.where(h >= 0, h, alpha[0, 0] * h)
    pos = enc(x)
    neg = enc(x_cor)
    summ = jax.nn.sigmoid(jnp.mean(pos, axis=0))
    return pos, neg, summ


if __name__ == "__main__":
    key = jax.random.PRNGKey(0)
    k_x, k_perm, k_we, k_be, k_w = jax.random.split(key, 5)

    N, F, H = 2048, 32, 64   # nodes, in-features, hidden_channels (2H = 128 lanes)
    TILE_N = 1024            # 2 grid steps: one per TensorCore on v7x, low overhead elsewhere

    # deterministic inputs / parameters (synthetic, no checkpoints)
    x = jax.random.normal(k_x, (N, F), dtype=jnp.float32)
    perm = jax.random.permutation(k_perm, N)
    x_cor = x[perm]                                               # corruption: row shuffle

    bound_e = 1.0 / jnp.sqrt(jnp.float32(F))
    w_enc = jax.random.uniform(k_we, (F, H), jnp.float32, -bound_e, bound_e)
    b_enc = jax.random.uniform(k_be, (1, H), jnp.float32, -bound_e, bound_e)
    alpha = jnp.full((1, 1), 0.25, jnp.float32)                   # PReLU default slope

    # module's bilinear weight: uniform(hidden_channels, weight) as in PyG DGI
    bound_w = 1.0 / jnp.sqrt(jnp.float32(H))
    dgi_weight = jax.random.uniform(k_w, (H, H), jnp.float32, -bound_w, bound_w)

    # forward: fused slab + summary (loss path consumes zz directly)
    zz, summary = dgi_forward_fused(x, x_cor, w_enc, b_enc, alpha, tile_n=TILE_N)
    jax.block_until_ready((zz, summary))

    # discriminator scores (module.discriminate, sigmoid=True) and loss
    pos_z, neg_z = zz[:, :H], zz[:, H:]                           # split only for API parity / checks
    scores = discriminate(pos_z, dgi_weight, summary, tile_n=TILE_N)
    loss = dgi_loss(zz, dgi_weight, summary, tile_n=TILE_N)
    jax.block_until_ready((scores, loss))

    # correctness check against pure-JAX reference
    pr, nr, sr = _forward_ref(x, x_cor, w_enc, b_enc, alpha)
    assert jnp.allclose(pos_z, pr, atol=1e-5), "pos_z mismatch"
    assert jnp.allclose(neg_z, nr, atol=1e-5), "neg_z mismatch"
    assert jnp.allclose(summary, sr, atol=1e-5), "summary mismatch"

    scores_ref = jax.nn.sigmoid(pr @ (dgi_weight @ sr))
    assert jnp.allclose(scores, scores_ref, atol=1e-5), "discriminate mismatch"

    loss_ref = (-jnp.log(jax.nn.sigmoid(pr @ (dgi_weight @ sr)) + EPS).mean()
                - jnp.log(1.0 - jax.nn.sigmoid(nr @ (dgi_weight @ sr)) + EPS).mean())
    assert jnp.allclose(loss, loss_ref, atol=1e-4), "loss mismatch"

    print("KERNEL_OK")
</pallas_src>

<mosaic_0001>
module attributes {stable_mosaic.version = 11 : i64} {
  func.func @_dgi_forward_kernel(%arg0: i32, %arg1: memref<1024x64xf32, #tpu.memory_space<vmem>>, %arg2: memref<64x128xf32, #tpu.memory_space<vmem>>, %arg3: memref<1x128xf32, #tpu.memory_space<vmem>>, %arg4: memref<1x1xf32, #tpu.memory_space<smem>>, %arg5: memref<1024x128xf32, #tpu.memory_space<vmem>>, %arg6: memref<8x128xf32, #tpu.memory_space<vmem>>) attributes {dimension_semantics = [#tpu.dimension_semantics<parallel>], iteration_bounds = array<i64: 2>, scalar_prefetch = 0 : i64, scratch_operands = 0 : i64, tpu.core_type = #tpu.core_type<tc>, window_params = [{transform_indices = @transform_0, window_bounds = array<i64: 1024, 64>}, {pipeline_mode = #tpu.pipeline_mode<synchronous>, transform_indices = @transform_1, window_bounds = array<i64: 64, 128>}, {pipeline_mode = #tpu.pipeline_mode<synchronous>, transform_indices = @transform_2, window_bounds = array<i64: 1, 128>}, {transform_indices = @transform_3, window_bounds = array<i64: 1, 1>}, {transform_indices = @transform_4, window_bounds = array<i64: 1024, 128>}, {transform_indices = @transform_5, window_bounds = array<i64: 8, 128>}]} {
    %c0 = arith.constant 0 : index
    %c0_0 = arith.constant 0 : index
    %0 = memref.load %arg4[%c0, %c0_0] : memref<1x1xf32, #tpu.memory_space<smem>>
    %c0_1 = arith.constant 0 : index
    %c0_2 = arith.constant 0 : index
    %1 = vector.load %arg1[%c0_1, %c0_2] : memref<1024x64xf32, #tpu.memory_space<vmem>>, vector<1024x64xf32>
    %c0_3 = arith.constant 0 : index
    %c0_4 = arith.constant 0 : index
    %2 = vector.load %arg2[%c0_3, %c0_4] : memref<64x128xf32, #tpu.memory_space<vmem>>, vector<64x128xf32>
    %cst = arith.constant dense<0.000000e+00> : vector<1024x128xf32>
    %3 = tpu.matmul %1, %2, %cst {dimension_numbers = #tpu.dot_dimension_numbers<[1], [0], [0], [1], [0, 0, 1, 1], [], []>} : vector<1024x64xf32>, vector<64x128xf32>, vector<1024x128xf32> -> vector<1024x128xf32>
    %c0_5 = arith.constant 0 : index
    %c0_6 = arith.constant 0 : index
    %4 = vector.load %arg3[%c0_5, %c0_6] : memref<1x128xf32, #tpu.memory_space<vmem>>, vector<1x128xf32>
    %5 = vector.broadcast %4 : vector<1x128xf32> to vector<1024x128xf32>
    %6 = arith.addf %3, %5 : vector<1024x128xf32>
    %cst_7 = arith.constant 0.000000e+00 : f32
    %7 = vector.broadcast %cst_7 : f32 to vector<1024x128xf32>
    %8 = arith.cmpf oge, %6, %7 : vector<1024x128xf32>
    %9 = vector.broadcast %0 : f32 to vector<1024x128xf32>
    %10 = arith.mulf %9, %6 : vector<1024x128xf32>
    %11 = arith.select %8, %6, %10 : vector<1024x128xi1>, vector<1024x128xf32>
    %c0_8 = arith.constant 0 : index
    %c0_9 = arith.constant 0 : index
    %12 = vector.load %arg5[%c0_8, %c0_9] : memref<1024x128xf32, #tpu.memory_space<vmem>>, vector<1024x128xf32>
    tpu.vector_store %arg5[%c0_8, %c0_9], %11 {strides = array<i32>} : memref<1024x128xf32, #tpu.memory_space<vmem>>, vector<1024x128xf32>,
    %cst_10 = arith.constant dense<0.000000e+00> : vector<128xf32>
    %13 = vector.multi_reduction <add>, %11, %cst_10 [0] : vector<1024x128xf32> to vector<128xf32>
    %14 = vector.shape_cast %13 : vector<128xf32> to vector<1x128xf32>
    %15 = tpu.iota {dimensions = array<i32: 0>} : vector<8x128xi32>
    %c0_i32 = arith.constant 0 : i32
    %16 = vector.broadcast %c0_i32 : i32 to vector<8x128xi32>
    %17 = arith.cmpi eq, %15, %16 : vector<8x128xi32>
    %cst_11 = arith.constant 0.000000e+00 : f32
    %18 = vector.shape_cast %14 : vector<1x128xf32> to vector<1x128xf32>
    %19 = vector.broadcast %18 : vector<1x128xf32> to vector<8x128xf32>
    %20 = vector.broadcast %cst_11 : f32 to vector<8x128xf32>
    %21 = arith.select %17, %19, %20 : vector<8x128xi1>, vector<8x128xf32>
    %c0_12 = arith.constant 0 : index
    %c0_13 = arith.constant 0 : index
    %22 = vector.load %arg6[%c0_12, %c0_13] : memref<8x128xf32, #tpu.memory_space<vmem>>, vector<8x128xf32>
    tpu.vector_store %arg6[%c0_12, %c0_13], %21 {strides = array<i32>} : memref<8x128xf32, #tpu.memory_space<vmem>>, vector<8x128xf32>,
    return
  }
  func.func @transform_0(%arg0: i32) -> (i32, i32) {
    %c0_i32 = arith.constant 0 : i32
    %c0_i32_0 = arith.constant 0 : i32
    return %arg0, %c0_i32 : i32, i32
  }
  func.func @transform_1(%arg0: i32) -> (i32, i32) {
    %c0_i32 = arith.constant 0 : i32
    %c0_i32_0 = arith.constant 0 : i32
    %c0_i32_1 = arith.constant 0 : i32
    return %c0_i32, %c0_i32_0 : i32, i32
  }
  func.func @transform_2(%arg0: i32) -> (i32, i32) {
    %c0_i32 = arith.constant 0 : i32
    %c0_i32_0 = arith.constant 0 : i32
    %c0_i32_1 = arith.constant 0 : i32
    return %c0_i32, %c0_i32_0 : i32, i32
  }
  func.func @transform_3(%arg0: i32) -> (i32, i32) {
    %c0_i32 = arith.constant 0 : i32
    %c0_i32_0 = arith.constant 0 : i32
    %c0_i32_1 = arith.constant 0 : i32
    return %c0_i32, %c0_i32_0 : i32, i32
  }
  func.func @transform_4(%arg0: i32) -> (i32, i32) {
    %c0_i32 = arith.constant 0 : i32
    %c0_i32_0 = arith.constant 0 : i32
    return %arg0, %c0_i32 : i32, i32
  }
  func.func @transform_5(%arg0: i32) -> (i32, i32) {
    %c0_i32 = arith.constant 0 : i32
    %c0_i32_0 = arith.constant 0 : i32
    return %arg0, %c0_i32 : i32, i32
  }
}

</mosaic_0001>

<llo_original>
// kernel: tpu_custom_call.1
$region0: #{tpu_custom_call.1}
  #allocation0 [shape = 'u32[]', space=smem, size = 0x4, offset = 0x4, fixed_abs, tag = 'smem constant byte address 0x4 - core index']
  #allocation1 [shape = 'u32[144,128]{1,0:T(1,128)}', space=vmem, size = 0x12000, scoped, tag = 'internal scratch']
  #allocation2 [shape = 'f32[1,1]{1,0:T(1,128)S(6)}', space=smem, size = 0x200, scoped, tag = 'scoped memory for tpu_custom_call.1']
  %s0 = inlined_call_operand.vmem [shape: f32[2048,64], index: 0, kind: input, shape index: {}]
  %s1 = inlined_call_operand.vmem [shape: f32[64,128], index: 1, kind: input, shape index: {}]
  %s2 = inlined_call_operand.vmem [shape: f32[1,128], index: 2, kind: input, shape index: {}]
  %s3 = inlined_call_operand.<no memory space> [shape: f32[1,1], index: 3, kind: input, shape index: {}]
  %s4 = inlined_call_operand.hbm [shape: f32[2048,128], index: 4, kind: output, shape index: {0}]
  %s5 = inlined_call_operand.hbm [shape: f32[16,128], index: 5, kind: output, shape index: {1}]
  %6 = xla_tuple %s4, %s5
  %s7 = sld [smem:[#allocation0]]
  $region57: #{tpu_custom_call.1} parent=0
    _
  %s9 = ssub.s32 1, %s7
  %s10 = scalar_select 0, %s9, %s7
  %11 = sst [smem:[#allocation2]] %s3
  $region1: #{tpu_custom_call.1} parent=0
    #allocation3 [shape = 'u8[1048576]{0}', space=vmem, size = 0x100000, scoped, tag = 'output window, operand 0']
    #allocation4 [shape = 's32[2]{0}', space=sflag, size = 0x8, scoped, tag = 'scoped memory for tpu_custom_call.1']
    #allocation5 [shape = 'u8[8192]{0}', space=vmem, size = 0x2000, scoped, tag = 'output window, operand 1']
    #allocation6 [shape = 's32[2]{0}', space=sflag, size = 0x8, scoped, tag = 'scoped memory for tpu_custom_call.1']
    %12 = vsyncpa [#allocation4], 0
    %s13 = scalar_lea.sflag [#allocation4], 1
    %14 = vsyncpa %s13, 0
    %15 = vsyncpa [#allocation6], 0
    %s16 = scalar_lea.sflag [#allocation6], 1
    %17 = vsyncpa %s16, 0
    loop: start=0, step=1, limit=4
    $region2: #{tpu_custom_call.1} parent=1 // loop_pre_header
      _
    $region3: #{tpu_custom_call.1} parent=1 // loop_header
      %s19 = sphi 0, %s23
      %p20 = scmp.ge.s32.totalorder %s19, 4
      %s29 = sphi 0, %s31
      %s32 = sphi 0, %s29
      %s33 = sphi 0, %s32
      %s49 = sphi 0, %s33
      %s53 = sphi 0, %s53
      %s55 = sphi 0, %s53
      %s56 = sphi 0, %s55
      %s70 = sphi 0, %s56
      %s74 = sphi 0, %s74
      %s76 = sphi 0, %s74
      %s77 = sphi 0, %s76
      %s91 = sphi 0, %s77
      %s95 = sphi 0, %s95
      %s97 = sphi 0, %s95
      %s98 = sphi 0, %s97
      %s112 = sphi 0, %s98
      %s118 = sphi 0, %s120
      %s121 = sphi 0, %s118
      %s122 = sphi 0, %s121
      %s138 = sphi 0, %s122
      %s144 = sphi 0, %s146
      %s147 = sphi 0, %s144
      %s148 = sphi 0, %s147
      %s164 = sphi 0, %s148
    $region4: #{tpu_custom_call.1} parent=1 // loop_header_branch
      %22 = sbr.rel (%p20) target = $region8
    $region5: #{tpu_custom_call.1} parent=1 // loop_body
      %s24 = ssub.s32 %s19, 1
      %s25 = ssub.s32 %s19, 2
      %s26 = sadd.s32 %s19, 1
      %s27 = ssub.s32 %s19, %s26
      %p28 = scmp.eq.s32.totalorder %s27, 0
      %s30 = sadd.s32 %s29, 1
      %s31 = scalar_select %p28, %s29, %s30
      %p34 = pneg %p28
      %p35 = scmp.eq.s32.totalorder %s19, 1
      %p36 = por %p34, %p35
      %p37 = scmp.ne.s32.totalorder %s29, %s32
      %p38 = scmp.eq.s32.totalorder %s19, 0
      %p39 = por %p37, %p38
      %p40 = scmp.ne.s32.totalorder %s29, %s32
      %p41 = scmp.eq.s32.totalorder %s24, 1
      %p42 = por %p40, %p41
      %p43 = scmp.ne.s32.totalorder %s32, %s33
      %p44 = scmp.eq.s32.totalorder %s24, 0
      %p45 = por %p43, %p44
      %p46 = scmp.ne.s32.totalorder %s32, %s33
      %p47 = scmp.eq.s32.totalorder %s25, 1
      %p48 = por %p46, %p47
      %p50 = scmp.ne.s32.totalorder %s33, %s49
      %p51 = scmp.eq.s32.totalorder %s25, 0
      %p52 = por %p50, %p51
      %s54 = sadd.s32 %s53, 1
      %p57 = scmp.eq.s32.totalorder %s19, 1
      %p58 = scmp.ne.s32.totalorder %s53, %s55
      %p59 = scmp.eq.s32.totalorder %s19, 0
      %p60 = por %p58, %p59
      %p61 = scmp.ne.s32.totalorder %s53, %s55
      %p62 = scmp.eq.s32.totalorder %s24, 1
      %p63 = por %p61, %p62
      %p64 = scmp.ne.s32.totalorder %s55, %s56
      %p65 = scmp.eq.s32.totalorder %s24, 0
      %p66 = por %p64, %p65
      %p67 = scmp.ne.s32.totalorder %s55, %s56
      %p68 = scmp.eq.s32.totalorder %s25, 1
      %p69 = por %p67, %p68
      %p71 = scmp.ne.s32.totalorder %s56, %s70
      %p72 = scmp.eq.s32.totalorder %s25, 0
      %p73 = por %p71, %p72
      %s75 = sadd.s32 %s74, 1
      %p78 = scmp.eq.s32.totalorder %s19, 1
      %p79 = scmp.ne.s32.totalorder %s74, %s76
      %p80 = scmp.eq.s32.totalorder %s19, 0
      %p81 = por %p79, %p80
      %p82 = scmp.ne.s32.totalorder %s74, %s76
      %p83 = scmp.eq.s32.totalorder %s24, 1
      %p84 = por %p82, %p83
      %p85 = scmp.ne.s32.totalorder %s76, %s77
      %p86 = scmp.eq.s32.totalorder %s24, 0
      %p87 = por %p85, %p86
      %p88 = scmp.ne.s32.totalorder %s76, %s77
      %p89 = scmp.eq.s32.totalorder %s25, 1
      %p90 = por %p88, %p89
      %p92 = scmp.ne.s32.totalorder %s77, %s91
      %p93 = scmp.eq.s32.totalorder %s25, 0
      %p94 = por %p92, %p93
      %s96 = sadd.s32 %s95, 1
      %p99 = scmp.eq.s32.totalorder %s19, 1
      %p100 = scmp.ne.s32.totalorder %s95, %s97
      %p101 = scmp.eq.s32.totalorder %s19, 0
      %p102 = por %p100, %p101
      %p103 = scmp.ne.s32.totalorder %s95, %s97
      %p104 = scmp.eq.s32.totalorder %s24, 1
      %p105 = por %p103, %p104
      %p106 = scmp.ne.s32.totalorder %s97, %s98
      %p107 = scmp.eq.s32.totalorder %s24, 0
      %p108 = por %p106, %p107
      %p109 = scmp.ne.s32.totalorder %s97, %s98
      %p110 = scmp.eq.s32.totalorder %s25, 1
      %p111 = por %p109, %p110
      %p113 = scmp.ne.s32.totalorder %s98, %s112
      %p114 = scmp.eq.s32.totalorder %s25, 0
      %p115 = por %p113, %p114
      %s116 = ssub.s32 %s19, %s26
      %p117 = scmp.eq.s32.totalorder %s116, 0
      %s119 = sadd.s32 %s118, 1
      %s120 = scalar_select %p117, %s118, %s119
      %p123 = pneg %p117
      %p124 = scmp.eq.s32.totalorder %s19, 1
      %p125 = por %p123, %p124
      %p126 = scmp.ne.s32.totalorder %s118, %s121
      %p127 = scmp.eq.s32.totalorder %s19, 0
      %p128 = por %p126, %p127
      %p129 = scmp.ne.s32.totalorder %s118, %s121
      %p130 = scmp.eq.s32.totalorder %s24, 1
      %p131 = por %p129, %p130
      %p132 = scmp.ne.s32.totalorder %s121, %s122
      %p133 = scmp.eq.s32.totalorder %s24, 0
      %p134 = por %p132, %p133
      %p135 = scmp.ne.s32.totalorder %s121, %s122
      %p136 = scmp.eq.s32.totalorder %s25, 1
      %p137 = por %p135, %p136
      %p139 = scmp.ne.s32.totalorder %s122, %s138
      %p140 = scmp.eq.s32.totalorder %s25, 0
      %p141 = por %p139, %p140
      %s142 = ssub.s32 %s19, %s26
      %p143 = scmp.eq.s32.totalorder %s142, 0
      %s145 = sadd.s32 %s144, 1
      %s146 = scalar_select %p143, %s144, %s145
      %p149 = pneg %p143
      %p150 = scmp.eq.s32.totalorder %s19, 1
      %p151 = por %p149, %p150
      %p152 = scmp.ne.s32.totalorder %s144, %s147
      %p153 = scmp.eq.s32.totalorder %s19, 0
      %p154 = por %p152, %p153
      %p155 = scmp.ne.s32.totalorder %s144, %s147
      %p156 = scmp.eq.s32.totalorder %s24, 1
      %p157 = por %p155, %p156
      %p158 = scmp.ne.s32.totalorder %s147, %s148
      %p159 = scmp.eq.s32.totalorder %s24, 0
      %p160 = por %p158, %p159
      %p161 = scmp.ne.s32.totalorder %s147, %s148
      %p162 = scmp.eq.s32.totalorder %s25, 1
      %p163 = por %p161, %p162
      %p165 = scmp.ne.s32.totalorder %s148, %s164
      %p166 = scmp.eq.s32.totalorder %s25, 0
      %p167 = por %p165, %p166
      %p168 = scmp.le.s32.totalorder 1, %s19
      %p169 = scmp.lt.s32.totalorder %s19, 3
      %p170 = pnand %p168, %p169
      %p171 = pneg %p170
      // Predicated region
      $region9: #{tpu_custom_call.1} parent=5 // pred_check
        _
      $region10: #{tpu_custom_call.1} parent=5 // pred_check_branch
        %173 = sbr.rel (%p170) target = $region12
      $region11: #{tpu_custom_call.1} parent=5 // pred_region
        %s174 = ssub.s32 %s19, 1
        // Predicated region
        $region13: #{tpu_custom_call.1} parent=11 // pred_check
          %p175 = pneg %p66
        $region14: #{tpu_custom_call.1} parent=11 // pred_check_branch
          %177 = sbr.rel (%p175) target = $region16
        $region15: #{tpu_custom_call.1} parent=11 // pred_region
          _
        $region16: #{tpu_custom_call.1} parent=11 // pred_fallthru
          _
        // Predicated region
        $region17: #{tpu_custom_call.1} parent=11 // pred_check
          %p178 = pneg %p87
        $region18: #{tpu_custom_call.1} parent=11 // pred_check_branch
          %180 = sbr.rel (%p178) target = $region20
        $region19: #{tpu_custom_call.1} parent=11 // pred_region
          _
        $region20: #{tpu_custom_call.1} parent=11 // pred_fallthru
          _
        // Predicated region
        $region21: #{tpu_custom_call.1} parent=11 // pred_check
          %p181 = pneg %p108
        $region22: #{tpu_custom_call.1} parent=11 // pred_check_branch
          %183 = sbr.rel (%p181) target = $region24
        $region23: #{tpu_custom_call.1} parent=11 // pred_region
          _
        $region24: #{tpu_custom_call.1} parent=11 // pred_fallthru
          _
      $region12: #{tpu_custom_call.1} parent=5 // pred_fallthru
        _
      %p184 = scmp.lt.s32.totalorder %s19, 2
      // Predicated region
      $region25: #{tpu_custom_call.1} parent=5 // pred_check
        %p185 = pneg %p184
      $region26: #{tpu_custom_call.1} parent=5 // pred_check_branch
        %187 = sbr.rel (%p185) target = $region28
      $region27: #{tpu_custom_call.1} parent=5 // pred_region
        // Predicated region
        $region29: #{tpu_custom_call.1} parent=27 // pred_check
          %p188 = pneg %p39
        $region30: #{tpu_custom_call.1} parent=27 // pred_check_branch
          %190 = sbr.rel (%p188) target = $region32
        $region31: #{tpu_custom_call.1} parent=27 // pred_region
          %s191 = smul.u32 128, %s19
          %p192 = scmp.lt.s32.totalorder %s191, 255
          %s193 = scalar_select %p192, %s191, 255
          %s194 = smul.addr %s193, 8
          %s195 = scalar_lea.vmem %s0, %s194
          %s196 = smul.u32 128, %s19
        $region32: #{tpu_custom_call.1} parent=27 // pred_fallthru
          _
      $region28: #{tpu_custom_call.1} parent=5 // pred_fallthru
        _
      %p197 = scmp.le.s32.totalorder 1, %s19
      %p198 = scmp.lt.s32.totalorder %s19, 3
      %p199 = pnand %p197, %p198
      %p200 = pneg %p199
      // Predicated region
      $region33: #{tpu_custom_call.1} parent=5 // pred_check
        _
      $region34: #{tpu_custom_call.1} parent=5 // pred_check_branch
        %202 = sbr.rel (%p199) target = $region36
      $region35: #{tpu_custom_call.1} parent=5 // pred_region
        %s203 = ssub.s32 %s19, 1
        %s204 = smul.u32 128, %s24
        %p205 = scmp.lt.s32.totalorder %s204, 255
        %s206 = scalar_select %p205, %s204, 255
        %s207 = smul.addr %s206, 8
        %s208 = scalar_lea.vmem %s0, %s207
        %p209 = pneg %p45
        %p210 = pneg %p42
        %p211 = pneg %p66
        %p212 = pneg %p63
        %p213 = pneg %p87
        %p214 = pneg %p84
        %p215 = pneg %p108
        %p216 = pneg %p105
        %p217 = pneg %p134
        %p218 = pneg %p131
        %s219 = sand.u32 %s121, 1
        %s220 = scalar_lea.sflag [#allocation4], %s219
        %s221 = sand.u32 %s121, 1
        %s222 = smul.addr %s221, 1024
        %s223 = scalar_lea.vmem [#allocation3], %s222
        %p224 = pneg %p160
        %p225 = pneg %p157
        %s226 = sand.u32 %s147, 1
        %s227 = scalar_lea.sflag [#allocation6], %s226
        %s228 = sand.u32 %s147, 1
        %s229 = smul.addr %s228, 8
        %s230 = scalar_lea.vmem [#allocation5], %s229
        %s231 = smul.u32 128, %s24
        %p232 = scmp.lt.s32.totalorder %s231, 255
        %s233 = scalar_select %p232, %s231, 255
        %s234 = smul.addr %s233, 8
        %s235 = scalar_lea.vmem %s0, %s234
        %s236 = smul.u32 128, %s24
        %s237 = smul.u32 128, %s24
        %s238 = sld [smem:[#allocation2]]
        %v239 = vld [vmem:[%s235] sm:$0xff]
        %v240 = vld [vmem:[%s235 + $0x8] sm:$0xff]
        %v241 = vld [vmem:[%s235 + $0x10] sm:$0xff]
        %v242 = vld [vmem:[%s235 + $0x18] sm:$0xff]
        %v243 = vld [vmem:[%s235 + $0x20] sm:$0xff]
        %v244 = vld [vmem:[%s235 + $0x28] sm:$0xff]
        %v245 = vld [vmem:[%s235 + $0x30] sm:$0xff]
        %v246 = vld [vmem:[%s235 + $0x38] sm:$0xff]
        %v247 = vld [vmem:[%s235 + $0x40] sm:$0xff]
        %v248 = vld [vmem:[%s235 + $0x48] sm:$0xff]
        %v249 = vld [vmem:[%s235 + $0x50] sm:$0xff]
        %v250 = vld [vmem:[%s235 + $0x58] sm:$0xff]
        %v251 = vld [vmem:[%s235 + $0x60] sm:$0xff]
        %v252 = vld [vmem:[%s235 + $0x68] sm:$0xff]
        %v253 = vld [vmem:[%s235 + $0x70] sm:$0xff]
        %v254 = vld [vmem:[%s235 + $0x78] sm:$0xff]
        %v255 = vld [vmem:[%s235 + $0x80] sm:$0xff]
        %v256 = vld [vmem:[%s235 + $0x88] sm:$0xff]
        %v257 = vld [vmem:[%s235 + $0x90] sm:$0xff]
        %v258 = vld [vmem:[%s235 + $0x98] sm:$0xff]
        %v259 = vld [vmem:[%s235 + $0xa0] sm:$0xff]
        %v260 = vld [vmem:[%s235 + $0xa8] sm:$0xff]
        %v261 = vld [vmem:[%s235 + $0xb0] sm:$0xff]
        %v262 = vld [vmem:[%s235 + $0xb8] sm:$0xff]
        %v263 = vld [vmem:[%s235 + $0xc0] sm:$0xff]
        %v264 = vld [vmem:[%s235 + $0xc8] sm:$0xff]
        %v265 = vld [vmem:[%s235 + $0xd0] sm:$0xff]
        %v266 = vld [vmem:[%s235 + $0xd8] sm:$0xff]
        %v267 = vld [vmem:[%s235 + $0xe0] sm:$0xff]
        %v268 = vld [vmem:[%s235 + $0xe8] sm:$0xff]
        %v269 = vld [vmem:[%s235 + $0xf0] sm:$0xff]
        %v270 = vld [vmem:[%s235 + $0xf8] sm:$0xff]
        %v271 = vld [vmem:[%s235 + $0x100] sm:$0xff]
        %v272 = vld [vmem:[%s235 + $0x108] sm:$0xff]
        %v273 = vld [vmem:[%s235 + $0x110] sm:$0xff]
        %v274 = vld [vmem:[%s235 + $0x118] sm:$0xff]
        %v275 = vld [vmem:[%s235 + $0x120] sm:$0xff]
        %v276 = vld [vmem:[%s235 + $0x128] sm:$0xff]
        %v277 = vld [vmem:[%s235 + $0x130] sm:$0xff]
        %v278 = vld [vmem:[%s235 + $0x138] sm:$0xff]
        %v279 = vld [vmem:[%s235 + $0x140] sm:$0xff]
        %v280 = vld [vmem:[%s235 + $0x148] sm:$0xff]
        %v281 = vld [vmem:[%s235 + $0x150] sm:$0xff]
        %v282 = vld [vmem:[%s235 + $0x158] sm:$0xff]
        %v283 = vld [vmem:[%s235 + $0x160] sm:$0xff]
        %v284 = vld [vmem:[%s235 + $0x168] sm:$0xff]
        %v285 = vld [vmem:[%s235 + $0x170] sm:$0xff]
        %v286 = vld [vmem:[%s235 + $0x178] sm:$0xff]
        %v287 = vld [vmem:[%s235 + $0x180] sm:$0xff]
        %v288 = vld [vmem:[%s235 + $0x188] sm:$0xff]
        %v289 = vld [vmem:[%s235 + $0x190] sm:$0xff]
        %v290 = vld [vmem:[%s235 + $0x198] sm:$0xff]
        %v291 = vld [vmem:[%s235 + $0x1a0] sm:$0xff]
        %v292 = vld [vmem:[%s235 + $0x1a8] sm:$0xff]
        %v293 = vld [vmem:[%s235 + $0x1b0] sm:$0xff]
        %v294 = vld [vmem:[%s235 + $0x1b8] sm:$0xff]
        %v295 = vld [vmem:[%s235 + $0x1c0] sm:$0xff]
        %v296 = vld [vmem:[%s235 + $0x1c8] sm:$0xff]
        %v297 = vld [vmem:[%s235 + $0x1d0] sm:$0xff]
        %v298 = vld [vmem:[%s235 + $0x1d8] sm:$0xff]
        %v299 = vld [vmem:[%s235 + $0x1e0] sm:$0xff]
        %v300 = vld [vmem:[%s235 + $0x1e8] sm:$0xff]
        %v301 = vld [vmem:[%s235 + $0x1f0] sm:$0xff]
        %v302 = vld [vmem:[%s235 + $0x1f8] sm:$0xff]
        %v303 = vld [vmem:[%s235 + $0x200] sm:$0xff]
        %v304 = vld [vmem:[%s235 + $0x208] sm:$0xff]
        %v305 = vld [vmem:[%s235 + $0x210] sm:$0xff]
        %v306 = vld [vmem:[%s235 + $0x218] sm:$0xff]
        %v307 = vld [vmem:[%s235 + $0x220] sm:$0xff]
        %v308 = vld [vmem:[%s235 + $0x228] sm:$0xff]
        %v309 = vld [vmem:[%s235 + $0x230] sm:$0xff]
        %v310 = vld [vmem:[%s235 + $0x238] sm:$0xff]
        %v311 = vld [vmem:[%s235 + $0x240] sm:$0xff]
        %v312 = vld [vmem:[%s235 + $0x248] sm:$0xff]
        %v313 = vld [vmem:[%s235 + $0x250] sm:$0xff]
        %v314 = vld [vmem:[%s235 + $0x258] sm:$0xff]
        %v315 = vld [vmem:[%s235 + $0x260] sm:$0xff]
        %v316 = vld [vmem:[%s235 + $0x268] sm:$0xff]
        %v317 = vld [vmem:[%s235 + $0x270] sm:$0xff]
        %v318 = vld [vmem:[%s235 + $0x278] sm:$0xff]
        %v319 = vld [vmem:[%s235 + $0x280] sm:$0xff]
        %v320 = vld [vmem:[%s235 + $0x288] sm:$0xff]
        %v321 = vld [vmem:[%s235 + $0x290] sm:$0xff]
        %v322 = vld [vmem:[%s235 + $0x298] sm:$0xff]
        %v323 = vld [vmem:[%s235 + $0x2a0] sm:$0xff]
        %v324 = vld [vmem:[%s235 + $0x2a8] sm:$0xff]
        %v325 = vld [vmem:[%s235 + $0x2b0] sm:$0xff]
        %v326 = vld [vmem:[%s235 + $0x2b8] sm:$0xff]
        %v327 = vld [vmem:[%s235 + $0x2c0] sm:$0xff]
        %v328 = vld [vmem:[%s235 + $0x2c8] sm:$0xff]
        %v329 = vld [vmem:[%s235 + $0x2d0] sm:$0xff]
        %v330 = vld [vmem:[%s235 + $0x2d8] sm:$0xff]
        %v331 = vld [vmem:[%s235 + $0x2e0] sm:$0xff]
        %v332 = vld [vmem:[%s235 + $0x2e8] sm:$0xff]
        %v333 = vld [vmem:[%s235 + $0x2f0] sm:$0xff]
        %v334 = vld [vmem:[%s235 + $0x2f8] sm:$0xff]
        %v335 = vld [vmem:[%s235 + $0x300] sm:$0xff]
        %v336 = vld [vmem:[%s235 + $0x308] sm:$0xff]
        %v337 = vld [vmem:[%s235 + $0x310] sm:$0xff]
        %v338 = vld [vmem:[%s235 + $0x318] sm:$0xff]
        %v339 = vld [vmem:[%s235 + $0x320] sm:$0xff]
        %v340 = vld [vmem:[%s235 + $0x328] sm:$0xff]
        %v341 = vld [vmem:[%s235 + $0x330] sm:$0xff]
        %v342 = vld [vmem:[%s235 + $0x338] sm:$0xff]
        %v343 = vld [vmem:[%s235 + $0x340] sm:$0xff]
        %v344 = vld [vmem:[%s235 + $0x348] sm:$0xff]
        %v345 = vld [vmem:[%s235 + $0x350] sm:$0xff]
        %v346 = vld [vmem:[%s235 + $0x358] sm:$0xff]
        %v347 = vld [vmem:[%s235 + $0x360] sm:$0xff]
        %v348 = vld [vmem:[%s235 + $0x368] sm:$0xff]
        %v349 = vld [vmem:[%s235 + $0x370] sm:$0xff]
        %v350 = vld [vmem:[%s235 + $0x378] sm:$0xff]
        %v351 = vld [vmem:[%s235 + $0x380] sm:$0xff]
        %v352 = vld [vmem:[%s235 + $0x388] sm:$0xff]
        %v353 = vld [vmem:[%s235 + $0x390] sm:$0xff]
        %v354 = vld [vmem:[%s235 + $0x398] sm:$0xff]
        %v355 = vld [vmem:[%s235 + $0x3a0] sm:$0xff]
        %v356 = vld [vmem:[%s235 + $0x3a8] sm:$0xff]
        %v357 = vld [vmem:[%s235 + $0x3b0] sm:$0xff]
        %v358 = vld [vmem:[%s235 + $0x3b8] sm:$0xff]
        %v359 = vld [vmem:[%s235 + $0x3c0] sm:$0xff]
        %v360 = vld [vmem:[%s235 + $0x3c8] sm:$0xff]
        %v361 = vld [vmem:[%s235 + $0x3d0] sm:$0xff]
        %v362 = vld [vmem:[%s235 + $0x3d8] sm:$0xff]
        %v363 = vld [vmem:[%s235 + $0x3e0] sm:$0xff]
        %v364 = vld [vmem:[%s235 + $0x3e8] sm:$0xff]
        %v365 = vld [vmem:[%s235 + $0x3f0] sm:$0xff]
        %v366 = vld [vmem:[%s235 + $0x3f8] sm:$0xff]
        %v367 = vld [vmem:[%s1] sm:$0xff]
        %v368 = vld [vmem:[%s1 + $0x8] sm:$0xff]
        %v369 = vld [vmem:[%s1 + $0x10] sm:$0xff]
        %v370 = vld [vmem:[%s1 + $0x18] sm:$0xff]
        %v371 = vld [vmem:[%s1 + $0x20] sm:$0xff]
        %v372 = vld [vmem:[%s1 + $0x28] sm:$0xff]
        %v373 = vld [vmem:[%s1 + $0x30] sm:$0xff]
        %v374 = vld [vmem:[%s1 + $0x38] sm:$0xff]
        %v375 = vld [vmem:[%s2] sm:$0x1]
        %v377 = vlaneseq
        %v378 = vshrl.u32 %v377, 7
        %v379 = vsub.s32 0, %v378
        %v380 = vrot.slane %v375, %v379
        %vm382 = vcmask 523264
        %v384 = vsel %vm382, %v239, 0
        %v387 = vsel %vm382, %v240, 0
        %v390 = vsel %vm382, %v241, 0
        %v393 = vsel %vm382, %v242, 0
        %v396 = vsel %vm382, %v243, 0
        %v399 = vsel %vm382, %v244, 0
        %v402 = vsel %vm382, %v245, 0
        %v405 = vsel %vm382, %v246, 0
        %v408 = vsel %vm382, %v247, 0
        %v411 = vsel %vm382, %v248, 0
        %v414 = vsel %vm382, %v249, 0
        %v417 = vsel %vm382, %v250, 0
        %v420 = vsel %vm382, %v251, 0
        %v423 = vsel %vm382, %v252, 0
        %v426 = vsel %vm382, %v253, 0
        %v429 = vsel %vm382, %v254, 0
        %v432 = vsel %vm382, %v255, 0
        %v435 = vsel %vm382, %v256, 0
        %v438 = vsel %vm382, %v257, 0
        %v441 = vsel %vm382, %v258, 0
        %v444 = vsel %vm382, %v259, 0
        %v447 = vsel %vm382, %v260, 0
        %v450 = vsel %vm382, %v261, 0
        %v453 = vsel %vm382, %v262, 0
        %v456 = vsel %vm382, %v263, 0
        %v459 = vsel %vm382, %v264, 0
        %v462 = vsel %vm382, %v265, 0
        %v465 = vsel %vm382, %v266, 0
        %v468 = vsel %vm382, %v267, 0
        %v471 = vsel %vm382, %v268, 0
        %v474 = vsel %vm382, %v269, 0
        %v477 = vsel %vm382, %v270, 0
        %v480 = vsel %vm382, %v271, 0
        %v483 = vsel %vm382, %v272, 0
        %v486 = vsel %vm382, %v273, 0
        %v489 = vsel %vm382, %v274, 0
        %v492 = vsel %vm382, %v275, 0
        %v495 = vsel %vm382, %v276, 0
        %v498 = vsel %vm382, %v277, 0
        %v501 = vsel %vm382, %v278, 0
        %v504 = vsel %vm382, %v279, 0
        %v507 = vsel %vm382, %v280, 0
        %v510 = vsel %vm382, %v281, 0
        %v513 = vsel %vm382, %v282, 0
        %v516 = vsel %vm382, %v283, 0
        %v519 = vsel %vm382, %v284, 0
        %v522 = vsel %vm382, %v285, 0
        %v525 = vsel %vm382, %v286, 0
        %v528 = vsel %vm382, %v287, 0
        %v531 = vsel %vm382, %v288, 0
        %v534 = vsel %vm382, %v289, 0
        %v537 = vsel %vm382, %v290, 0
        %v540 = vsel %vm382, %v291, 0
        %v543 = vsel %vm382, %v292, 0
        %v546 = vsel %vm382, %v293, 0
        %v549 = vsel %vm382, %v294, 0
        %v552 = vsel %vm382, %v295, 0
        %v555 = vsel %vm382, %v296, 0
        %v558 = vsel %vm382, %v297, 0
        %v561 = vsel %vm382, %v298, 0
        %v564 = vsel %vm382, %v299, 0
        %v567 = vsel %vm382, %v300, 0
        %v570 = vsel %vm382, %v301, 0
        %v573 = vsel %vm382, %v302, 0
        %v576 = vsel %vm382, %v303, 0
        %v579 = vsel %vm382, %v304, 0
        %v582 = vsel %vm382, %v305, 0
        %v585 = vsel %vm382, %v306, 0
        %v588 = vsel %vm382, %v307, 0
        %v591 = vsel %vm382, %v308, 0
        %v594 = vsel %vm382, %v309, 0
        %v597 = vsel %vm382, %v310, 0
        %v600 = vsel %vm382, %v311, 0
        %v603 = vsel %vm382, %v312, 0
        %v606 = vsel %vm382, %v313, 0
        %v609 = vsel %vm382, %v314, 0
        %v612 = vsel %vm382, %v315, 0
        %v615 = vsel %vm382, %v316, 0
        %v618 = vsel %vm382, %v317, 0
        %v621 = vsel %vm382, %v318, 0
        %v624 = vsel %vm382, %v319, 0
        %v627 = vsel %vm382, %v320, 0
        %v630 = vsel %vm382, %v321, 0
        %v633 = vsel %vm382, %v322, 0
        %v636 = vsel %vm382, %v323, 0
        %v639 = vsel %vm382, %v324, 0
        %v642 = vsel %vm382, %v325, 0
        %v645 = vsel %vm382, %v326, 0
        %v648 = vsel %vm382, %v327, 0
        %v651 = vsel %vm382, %v328, 0
        %v654 = vsel %vm382, %v329, 0
        %v657 = vsel %vm382, %v330, 0
        %v660 = vsel %vm382, %v331, 0
        %v663 = vsel %vm382, %v332, 0
        %v666 = vsel %vm382, %v333, 0
        %v669 = vsel %vm382, %v334, 0
        %v672 = vsel %vm382, %v335, 0
        %v675 = vsel %vm382, %v336, 0
        %v678 = vsel %vm382, %v337, 0
        %v681 = vsel %vm382, %v338, 0
        %v684 = vsel %vm382, %v339, 0
        %v687 = vsel %vm382, %v340, 0
        %v690 = vsel %vm382, %v341, 0
        %v693 = vsel %vm382, %v342, 0
        %v696 = vsel %vm382, %v343, 0
        %v699 = vsel %vm382, %v344, 0
        %v702 = vsel %vm382, %v345, 0
        %v705 = vsel %vm382, %v346, 0
        %v708 = vsel %vm382, %v347, 0
        %v711 = vsel %vm382, %v348, 0
        %v714 = vsel %vm382, %v349, 0
        %v717 = vsel %vm382, %v350, 0
        %v720 = vsel %vm382, %v351, 0
        %v723 = vsel %vm382, %v352, 0
        %v726 = vsel %vm382, %v353, 0
        %v729 = vsel %vm382, %v354, 0
        %v732 = vsel %vm382, %v355, 0
        %v735 = vsel %vm382, %v356, 0
        %v738 = vsel %vm382, %v357, 0
        %v741 = vsel %vm382, %v358, 0
        %v744 = vsel %vm382, %v359, 0
        %v747 = vsel %vm382, %v360, 0
        %v750 = vsel %vm382, %v361, 0
        %v753 = vsel %vm382, %v362, 0
        %v756 = vsel %vm382, %v363, 0
        %v759 = vsel %vm382, %v364, 0
        %v762 = vsel %vm382, %v365, 0
        %v765 = vsel %vm382, %v366, 0
        %767 = vmatprep.subr.mxu0 0.0
        %768 = vmatpush1.msra.mxu0 %v367
        %769 = vmatprep.subr.mxu0 0.0
        %770 = vmatpush1.msra.mxu0 %v368
        %771 = vmatprep.subr.mxu0 0.0
        %772 = vmatpush1.msra.mxu0 %v369
        %773 = vmatprep.subr.mxu0 0.0
        %774 = vmatpush1.msra.mxu0 %v370
        %775 = vmatprep.subr.mxu0 0.0
        %776 = vmatpush1.msra.mxu0 %v371
        %777 = vmatprep.subr.mxu0 0.0
        %778 = vmatpush1.msra.mxu0 %v372
        %779 = vmatprep.subr.mxu0 0.0
        %780 = vmatpush1.msra.mxu0 %v373
        %781 = vmatprep.subr.mxu0 0.0
        %782 = vmatpush1.msra.mxu0 %v374
        %783 = vmatprep.subr.mxu0 0.0
        %784 = vmatpush1.msra.mxu0 0.0
        %785 = vmatprep.subr.mxu0 0.0
        %786 = vmatpush1.msra.mxu0 0.0
        %787 = vmatprep.subr.mxu0 0.0
        %788 = vmatpush1.msra.mxu0 0.0
        %789 = vmatprep.subr.mxu0 0.0
        %790 = vmatpush1.msra.mxu0 0.0
        %791 = vmatprep.subr.mxu0 0.0
        %792 = vmatpush1.msra.mxu0 0.0
        %793 = vmatprep.subr.mxu0 0.0
        %794 = vmatpush1.msra.mxu0 0.0
        %795 = vmatprep.subr.mxu0 0.0
        %796 = vmatpush1.msra.mxu0 0.0
        %797 = vmatprep.subr.mxu0 0.0
        %798 = vmatpush1.msra.mxu0 0.0
        %799 = vmatprep.subr.mxu0 0.0
        %800 = vmatpush1.msra.mxu0 0.0
        %801 = vmatprep.subr.mxu0 0.0
        %802 = vmatpush1.msra.mxu0 0.0
        %803 = vmatprep.subr.mxu0 0.0
        %804 = vmatpush1.msra.mxu0 0.0
        %805 = vmatprep.subr.mxu0 0.0
        %806 = vmatpush1.msra.mxu0 0.0
        %807 = vmatprep.subr.mxu0 0.0
        %808 = vmatpush1.msra.mxu0 0.0
        %809 = vmatprep.subr.mxu0 0.0
        %810 = vmatpush1.msra.mxu0 0.0
        %811 = vmatprep.subr.mxu0 0.0
        %812 = vmatpush1.msra.mxu0 0.0
        %813 = vmatprep.subr.mxu0 0.0
        %814 = vmatpush1.msra.mxu0 0.0
        %815 = vmatprep.subr.mxu0 0.0
        %816 = vmatpush1.msra.mxu0 0.0
        %817 = vmatprep.subr.mxu0 0.0
        %818 = vmatpush1.msra.mxu0 0.0
        %819 = vmatprep.subr.mxu0 0.0
        %820 = vmatpush1.msra.mxu0 0.0
        %821 = vmatprep.subr.mxu0 0.0
        %822 = vmatpush1.msra.mxu0 0.0
        %823 = vmatprep.subr.mxu0 0.0
        %824 = vmatpush1.msra.mxu0 0.0
        %825 = vmatprep.subr.mxu0 0.0
        %826 = vmatpush1.msra.mxu0 0.0
        %827 = vmatprep.subr.mxu0 0.0
        %828 = vmatpush1.msra.mxu0 0.0
        %829 = vmatprep.subr.mxu0 0.0
        %830 = vmatpush1.msra.mxu0 0.0
        %831 = vmatprep.mubr.f32.mxu0 0.0
        %832 = vmatmul.mubr.f32.gmra.mrb[0].mxu0 %v384
        %v833 = vpop.f32.mrb[0].mxu0
        %v834 = vadd.f32 %v380, %v833
        %v835 = vpop.f32.mrb[0].mxu0
        %836 = vmatprep.mubr.f32.mxu0 0.0
        %837 = vmatmul.mubr.f32.gmra.mrb[0].mxu0 %v387
        %v838 = vpop.f32.mrb[0].mxu0
        %v839 = vadd.f32 %v380, %v838
        %v840 = vpop.f32.mrb[0].mxu0
        %841 = vmatprep.mubr.f32.mxu0 0.0
        %842 = vmatmul.mubr.f32.gmra.mrb[0].mxu0 %v390
        %v843 = vpop.f32.mrb[0].mxu0
        %v844 = vadd.f32 %v380, %v843
        %v845 = vpop.f32.mrb[0].mxu0
        %846 = vmatprep.mubr.f32.mxu0 0.0
        %847 = vmatmul.mubr.f32.gmra.mrb[0].mxu0 %v393
        %v848 = vpop.f32.mrb[0].mxu0
        %v849 = vadd.f32 %v380, %v848
        %v850 = vpop.f32.mrb[0].mxu0
        %851 = vmatprep.mubr.f32.mxu0 0.0
        %852 = vmatmul.mubr.f32.gmra.mrb[0].mxu0 %v396
        %v853 = vpop.f32.mrb[0].mxu0
        %v854 = vadd.f32 %v380, %v853
        %v855 = vpop.f32.mrb[0].mxu0
        %856 = vmatprep.mubr.f32.mxu0 0.0
        %857 = vmatmul.mubr.f32.gmra.mrb[0].mxu0 %v399
        %v858 = vpop.f32.mrb[0].mxu0
        %v859 = vadd.f32 %v380, %v858
        %v860 = vpop.f32.mrb[0].mxu0
        %861 = vmatprep.mubr.f32.mxu0 0.0
        %862 = vmatmul.mubr.f32.gmra.mrb[0].mxu0 %v402
        %v863 = vpop.f32.mrb[0].mxu0
        %v864 = vadd.f32 %v380, %v863
        %v865 = vpop.f32.mrb[0].mxu0
        %866 = vmatprep.mubr.f32.mxu0 0.0
        %867 = vmatmul.mubr.f32.gmra.mrb[0].mxu0 %v405
        %v868 = vpop.f32.mrb[0].mxu0
        %v869 = vadd.f32 %v380, %v868
        %v870 = vpop.f32.mrb[0].mxu0
        %871 = vmatprep.mubr.f32.mxu0 0.0
        %872 = vmatmul.mubr.f32.gmra.mrb[0].mxu0 %v408
        %v873 = vpop.f32.mrb[0].mxu0
        %v874 = vadd.f32 %v380, %v873
        %v875 = vpop.f32.mrb[0].mxu0
        %876 = vmatprep.mubr.f32.mxu0 0.0
        %877 = vmatmul.mubr.f32.gmra.mrb[0].mxu0 %v411
        %v878 = vpop.f32.mrb[0].mxu0
        %v879 = vadd.f32 %v380, %v878
        %v880 = vpop.f32.mrb[0].mxu0
        %881 = vmatprep.mubr.f32.mxu0 0.0
        %882 = vmatmul.mubr.f32.gmra.mrb[0].mxu0 %v414
        %v883 = vpop.f32.mrb[0].mxu0
        %v884 = vadd.f32 %v380, %v883
        %v885 = vpop.f32.mrb[0].mxu0
        %886 = vmatprep.mubr.f32.mxu0 0.0
        %887 = vmatmul.mubr.f32.gmra.mrb[0].mxu0 %v417
        %v888 = vpop.f32.mrb[0].mxu0
        %v889 = vadd.f32 %v380, %v888
        %v890 = vpop.f32.mrb[0].mxu0
        %891 = vmatprep.mubr.f32.mxu0 0.0
        %892 = vmatmul.mubr.f32.gmra.mrb[0].mxu0 %v420
        %v893 = vpop.f32.mrb[0].mxu0
        %v894 = vadd.f32 %v380, %v893
        %v895 = vpop.f32.mrb[0].mxu0
        %896 = vmatprep.mubr.f32.mxu0 0.0
        %897 = vmatmul.mubr.f32.gmra.mrb[0].mxu0 %v423
        %v898 = vpop.f32.mrb[0].mxu0
        %v899 = vadd.f32 %v380, %v898
        %v900 = vpop.f32.mrb[0].mxu0
        %901 = vmatprep.mubr.f32.mxu0 0.0
        %902 = vmatmul.mubr.f32.gmra.mrb[0].mxu0 %v426
        %v903 = vpop.f32.mrb[0].mxu0
        %v904 = vadd.f32 %v380, %v903
        %v905 = vpop.f32.mrb[0].mxu0
        %906 = vmatprep.mubr.f32.mxu0 0.0
        %907 = vmatmul.mubr.f32.gmra.mrb[0].mxu0 %v429
        %v908 = vpop.f32.mrb[0].mxu0
        %v909 = vadd.f32 %v380, %v908
        %v910 = vpop.f32.mrb[0].mxu0
        %911 = vmatprep.mubr.f32.mxu0 0.0
        %912 = vmatmul.mubr.f32.gmra.mrb[0].mxu0 %v432
        %v913 = vpop.f32.mrb[0].mxu0
        %v914 = vadd.f32 %v380, %v913
        %v915 = vpop.f32.mrb[0].mxu0
        %916 = vmatprep.mubr.f32.mxu0 0.0
        %917 = vmatmul.mubr.f32.gmra.mrb[0].mxu0 %v435
        %v918 = vpop.f32.mrb[0].mxu0
        %v919 = vadd.f32 %v380, %v918
        %v920 = vpop.f32.mrb[0].mxu0
        %921 = vmatprep.mubr.f32.mxu0 0.0
        %922 = vmatmul.mubr.f32.gmra.mrb[0].mxu0 %v438
        %v923 = vpop.f32.mrb[0].mxu0
        %v924 = vadd.f32 %v380, %v923
        %v925 = vpop.f32.mrb[0].mxu0
        %926 = vmatprep.mubr.f32.mxu0 0.0
        %927 = vmatmul.mubr.f32.gmra.mrb[0].mxu0 %v441
        %v928 = vpop.f32.mrb[0].mxu0
        %v929 = vadd.f32 %v380, %v928
        %v930 = vpop.f32.mrb[0].mxu0
        %931 = vmatprep.mubr.f32.mxu0 0.0
        %932 = vmatmul.mubr.f32.gmra.mrb[0].mxu0 %v444
        %v933 = vpop.f32.mrb[0].mxu0
        %v934 = vadd.f32 %v380, %v933
        %v935 = vpop.f32.mrb[0].mxu0
        %936 = vmatprep.mubr.f32.mxu0 0.0
        %937 = vmatmul.mubr.f32.gmra.mrb[0].mxu0 %v447
        %v938 = vpop.f32.mrb[0].mxu0
        %v939 = vadd.f32 %v380, %v938
        %v940 = vpop.f32.mrb[0].mxu0
        %941 = vmatprep.mubr.f32.mxu0 0.0
        %942 = vmatmul.mubr.f32.gmra.mrb[0].mxu0 %v450
        %v943 = vpop.f32.mrb[0].mxu0
        %v944 = vadd.f32 %v380, %v943
        %v945 = vpop.f32.mrb[0].mxu0
        %946 = vmatprep.mubr.f32.mxu0 0.0
        %947 = vmatmul.mubr.f32.gmra.mrb[0].mxu0 %v453
        %v948 = vpop.f32.mrb[0].mxu0
        %v949 = vadd.f32 %v380, %v948
        %v950 = vpop.f32.mrb[0].mxu0
        %951 = vmatprep.mubr.f32.mxu0 0.0
        %952 = vmatmul.mubr.f32.gmra.mrb[0].mxu0 %v456
        %v953 = vpop.f32.mrb[0].mxu0
        %v954 = vadd.f32 %v380, %v953
        %v955 = vpop.f32.mrb[0].mxu0
        %956 = vmatprep.mubr.f32.mxu0 0.0
        %957 = vmatmul.mubr.f32.gmra.mrb[0].mxu0 %v459
        %v958 = vpop.f32.mrb[0].mxu0
        %v959 = vadd.f32 %v380, %v958
        %v960 = vpop.f32.mrb[0].mxu0
        %961 = vmatprep.mubr.f32.mxu0 0.0
        %962 = vmatmul.mubr.f32.gmra.mrb[0].mxu0 %v462
        %v963 = vpop.f32.mrb[0].mxu0
        %v964 = vadd.f32 %v380, %v963
        %v965 = vpop.f32.mrb[0].mxu0
        %966 = vmatprep.mubr.f32.mxu0 0.0
        %967 = vmatmul.mubr.f32.gmra.mrb[0].mxu0 %v465
        %v968 = vpop.f32.mrb[0].mxu0
        %v969 = vadd.f32 %v380, %v968
        %v970 = vpop.f32.mrb[0].mxu0
        %971 = vmatprep.mubr.f32.mxu0 0.0
        %972 = vmatmul.mubr.f32.gmra.mrb[0].mxu0 %v468
        %v973 = vpop.f32.mrb[0].mxu0
        %v974 = vadd.f32 %v380, %v973
        %v975 = vpop.f32.mrb[0].mxu0
        %976 = vmatprep.mubr.f32.mxu0 0.0
        %977 = vmatmul.mubr.f32.gmra.mrb[0].mxu0 %v471
        %v978 = vpop.f32.mrb[0].mxu0
        %v979 = vadd.f32 %v380, %v978
        %v980 = vpop.f32.mrb[0].mxu0
        %981 = vmatprep.mubr.f32.mxu0 0.0
        %982 = vmatmul.mubr.f32.gmra.mrb[0].mxu0 %v474
        %v983 = vpop.f32.mrb[0].mxu0
        %v984 = vadd.f32 %v380, %v983
        %v985 = vpop.f32.mrb[0].mxu0
        %986 = vmatprep.mubr.f32.mxu0 0.0
        %987 = vmatmul.mubr.f32.gmra.mrb[0].mxu0 %v477
        %v988 = vpop.f32.mrb[0].mxu0
        %v989 = vadd.f32 %v380, %v988
        %v990 = vpop.f32.mrb[0].mxu0
        %991 = vmatprep.mubr.f32.mxu0 0.0
        %992 = vmatmul.mubr.f32.gmra.mrb[0].mxu0 %v480
        %v993 = vpop.f32.mrb[0].mxu0
        %v994 = vadd.f32 %v380, %v993
        %v995 = vpop.f32.mrb[0].mxu0
        %996 = vmatprep.mubr.f32.mxu0 0.0
        %997 = vmatmul.mubr.f32.gmra.mrb[0].mxu0 %v483
        %v998 = vpop.f32.mrb[0].mxu0
        %v999 = vadd.f32 %v380, %v998
        %v1000 = vpop.f32.mrb[0].mxu0
        %1001 = vmatprep.mubr.f32.mxu0 0.0
        %1002 = vmatmul.mubr.f32.gmra.mrb[0].mxu0 %v486
        %v1003 = vpop.f32.mrb[0].mxu0
        %v1004 = vadd.f32 %v380, %v1003
        %v1005 = vpop.f32.mrb[0].mxu0
        %1006 = vmatprep.mubr.f32.mxu0 0.0
        %1007 = vmatmul.mubr.f32.gmra.mrb[0].mxu0 %v489
        %v1008 = vpop.f32.mrb[0].mxu0
        %v1009 = vadd.f32 %v380, %v1008
        %v1010 = vpop.f32.mrb[0].mxu0
        %1011 = vmatprep.mubr.f32.mxu0 0.0
        %1012 = vmatmul.mubr.f32.gmra.mrb[0].mxu0 %v492
        %v1013 = vpop.f32.mrb[0].mxu0
        %v1014 = vadd.f32 %v380, %v1013
        %v1015 = vpop.f32.mrb[0].mxu0
        %1016 = vmatprep.mubr.f32.mxu0 0.0
        %1017 = vmatmul.mubr.f32.gmra.mrb[0].mxu0 %v495
        %v1018 = vpop.f32.mrb[0].mxu0
        %v1019 = vadd.f32 %v380, %v1018
        %v1020 = vpop.f32.mrb[0].mxu0
        %1021 = vmatprep.mubr.f32.mxu0 0.0
        %1022 = vmatmul.mubr.f32.gmra.mrb[0].mxu0 %v498
        %v1023 = vpop.f32.mrb[0].mxu0
        %v1024 = vadd.f32 %v380, %v1023
        %v1025 = vpop.f32.mrb[0].mxu0
        %1026 = vmatprep.mubr.f32.mxu0 0.0
        %1027 = vmatmul.mubr.f32.gmra.mrb[0].mxu0 %v501
        %v1028 = vpop.f32.mrb[0].mxu0
        %v1029 = vadd.f32 %v380, %v1028
        %v1030 = vpop.f32.mrb[0].mxu0
        %1031 = vmatprep.mubr.f32.mxu0 0.0
        %1032 = vmatmul.mubr.f32.gmra.mrb[0].mxu0 %v504
        %v1033 = vpop.f32.mrb[0].mxu0
        %v1034 = vadd.f32 %v380, %v1033
        %v1035 = vpop.f32.mrb[0].mxu0
        %1036 = vmatprep.mubr.f32.mxu0 0.0
        %1037 = vmatmul.mubr.f32.gmra.mrb[0].mxu0 %v507
        %v1038 = vpop.f32.mrb[0].mxu0
        %v1039 = vadd.f32 %v380, %v1038
        %v1040 = vpop.f32.mrb[0].mxu0
        %1041 = vmatprep.mubr.f32.mxu0 0.0
        %1042 = vmatmul.mubr.f32.gmra.mrb[0].mxu0 %v510
        %v1043 = vpop.f32.mrb[0].mxu0
        %v1044 = vadd.f32 %v380, %v1043
        %v1045 = vpop.f32.mrb[0].mxu0
        %1046 = vmatprep.mubr.f32.mxu0 0.0
        %1047 = vmatmul.mubr.f32.gmra.mrb[0].mxu0 %v513
        %v1048 = vpop.f32.mrb[0].mxu0
        %v1049 = vadd.f32 %v380, %v1048
        %v1050 = vpop.f32.mrb[0].mxu0
        %1051 = vmatprep.mubr.f32.mxu0 0.0
        %1052 = vmatmul.mubr.f32.gmra.mrb[0].mxu0 %v516
        %v1053 = vpop.f32.mrb[0].mxu0
        %v1054 = vadd.f32 %v380, %v1053
        %v1055 = vpop.f32.mrb[0].mxu0
        %1056 = vmatprep.mubr.f32.mxu0 0.0
        %1057 = vmatmul.mubr.f32.gmra.mrb[0].mxu0 %v519
        %v1058 = vpop.f32.mrb[0].mxu0
        %v1059 = vadd.f32 %v380, %v1058
        %v1060 = vpop.f32.mrb[0].mxu0
        %1061 = vmatprep.mubr.f32.mxu0 0.0
        %1062 = vmatmul.mubr.f32.gmra.mrb[0].mxu0 %v522
        %v1063 = vpop.f32.mrb[0].mxu0
        %v1064 = vadd.f32 %v380, %v1063
        %v1065 = vpop.f32.mrb[0].mxu0
        %1066 = vmatprep.mubr.f32.mxu0 0.0
        %1067 = vmatmul.mubr.f32.gmra.mrb[0].mxu0 %v525
        %v1068 = vpop.f32.mrb[0].mxu0
        %v1069 = vadd.f32 %v380, %v1068
        %v1070 = vpop.f32.mrb[0].mxu0
        %1071 = vmatprep.mubr.f32.mxu0 0.0
        %1072 = vmatmul.mubr.f32.gmra.mrb[0].mxu0 %v528
        %v1073 = vpop.f32.mrb[0].mxu0
        %v1074 = vadd.f32 %v380, %v1073
        %v1075 = vpop.f32.mrb[0].mxu0
        %1076 = vmatprep.mubr.f32.mxu0 0.0
        %1077 = vmatmul.mubr.f32.gmra.mrb[0].mxu0 %v531
        %v1078 = vpop.f32.mrb[0].mxu0
        %v1079 = vadd.f32 %v380, %v1078
        %v1080 = vpop.f32.mrb[0].mxu0
        %1081 = vmatprep.mubr.f32.mxu0 0.0
        %1082 = vmatmul.mubr.f32.gmra.mrb[0].mxu0 %v534
        %v1083 = vpop.f32.mrb[0].mxu0
        %v1084 = vadd.f32 %v380, %v1083
        %v1085 = vpop.f32.mrb[0].mxu0
        %1086 = vmatprep.mubr.f32.mxu0 0.0
        %1087 = vmatmul.mubr.f32.gmra.mrb[0].mxu0 %v537
        %v1088 = vpop.f32.mrb[0].mxu0
        %v1089 = vadd.f32 %v380, %v1088
        %v1090 = vpop.f32.mrb[0].mxu0
        %1091 = vmatprep.mubr.f32.mxu0 0.0
        %1092 = vmatmul.mubr.f32.gmra.mrb[0].mxu0 %v540
        %v1093 = vpop.f32.mrb[0].mxu0
        %v1094 = vadd.f32 %v380, %v1093
        %v1095 = vpop.f32.mrb[0].mxu0
        %1096 = vmatprep.mubr.f32.mxu0 0.0
        %1097 = vmatmul.mubr.f32.gmra.mrb[0].mxu0 %v543
        %v1098 = vpop.f32.mrb[0].mxu0
        %v1099 = vadd.f32 %v380, %v1098
        %v1100 = vpop.f32.mrb[0].mxu0
        %1101 = vmatprep.mubr.f32.mxu0 0.0
        %1102 = vmatmul.mubr.f32.gmra.mrb[0].mxu0 %v546
        %v1103 = vpop.f32.mrb[0].mxu0
        %v1104 = vadd.f32 %v380, %v1103
        %v1105 = vpop.f32.mrb[0].mxu0
        %1106 = vmatprep.mubr.f32.mxu0 0.0
        %1107 = vmatmul.mubr.f32.gmra.mrb[0].mxu0 %v549
        %v1108 = vpop.f32.mrb[0].mxu0
        %v1109 = vadd.f32 %v380, %v1108
        %v1110 = vpop.f32.mrb[0].mxu0
        %1111 = vmatprep.mubr.f32.mxu0 0.0
        %1112 = vmatmul.mubr.f32.gmra.mrb[0].mxu0 %v552
        %v1113 = vpop.f32.mrb[0].mxu0
        %v1114 = vadd.f32 %v380, %v1113
        %v1115 = vpop.f32.mrb[0].mxu0
        %1116 = vmatprep.mubr.f32.mxu0 0.0
        %1117 = vmatmul.mubr.f32.gmra.mrb[0].mxu0 %v555
        %v1118 = vpop.f32.mrb[0].mxu0
        %v1119 = vadd.f32 %v380, %v1118
        %v1120 = vpop.f32.mrb[0].mxu0
        %1121 = vmatprep.mubr.f32.mxu0 0.0
        %1122 = vmatmul.mubr.f32.gmra.mrb[0].mxu0 %v558
        %v1123 = vpop.f32.mrb[0].mxu0
        %v1124 = vadd.f32 %v380, %v1123
        %v1125 = vpop.f32.mrb[0].mxu0
        %1126 = vmatprep.mubr.f32.mxu0 0.0
        %1127 = vmatmul.mubr.f32.gmra.mrb[0].mxu0 %v561
        %v1128 = vpop.f32.mrb[0].mxu0
        %v1129 = vadd.f32 %v380, %v1128
        %v1130 = vpop.f32.mrb[0].mxu0
        %1131 = vmatprep.mubr.f32.mxu0 0.0
        %1132 = vmatmul.mubr.f32.gmra.mrb[0].mxu0 %v564
        %v1133 = vpop.f32.mrb[0].mxu0
        %v1134 = vadd.f32 %v380, %v1133
        %v1135 = vpop.f32.mrb[0].mxu0
        %1136 = vmatprep.mubr.f32.mxu0 0.0
        %1137 = vmatmul.mubr.f32.gmra.mrb[0].mxu0 %v567
        %v1138 = vpop.f32.mrb[0].mxu0
        %v1139 = vadd.f32 %v380, %v1138
        %v1140 = vpop.f32.mrb[0].mxu0
        %1141 = vmatprep.mubr.f32.mxu0 0.0
        %1142 = vmatmul.mubr.f32.gmra.mrb[0].mxu0 %v570
        %v1143 = vpop.f32.mrb[0].mxu0
        %v1144 = vadd.f32 %v380, %v1143
        %v1145 = vpop.f32.mrb[0].mxu0
        %1146 = vmatprep.mubr.f32.mxu0 0.0
        %1147 = vmatmul.mubr.f32.gmra.mrb[0].mxu0 %v573
        %v1148 = vpop.f32.mrb[0].mxu0
        %v1149 = vadd.f32 %v380, %v1148
        %v1150 = vpop.f32.mrb[0].mxu0
        %1151 = vmatprep.mubr.f32.mxu0 0.0
        %1152 = vmatmul.mubr.f32.gmra.mrb[0].mxu0 %v576
        %v1153 = vpop.f32.mrb[0].mxu0
        %v1154 = vadd.f32 %v380, %v1153
        %v1155 = vpop.f32.mrb[0].mxu0
        %1156 = vmatprep.mubr.f32.mxu0 0.0
        %1157 = vmatmul.mubr.f32.gmra.mrb[0].mxu0 %v579
        %v1158 = vpop.f32.mrb[0].mxu0
        %v1159 = vadd.f32 %v380, %v1158
        %v1160 = vpop.f32.mrb[0].mxu0
        %1161 = vmatprep.mubr.f32.mxu0 0.0
        %1162 = vmatmul.mubr.f32.gmra.mrb[0].mxu0 %v582
        %v1163 = vpop.f32.mrb[0].mxu0
        %v1164 = vadd.f32 %v380, %v1163
        %v1165 = vpop.f32.mrb[0].mxu0
        %1166 = vmatprep.mubr.f32.mxu0 0.0
        %1167 = vmatmul.mubr.f32.gmra.mrb[0].mxu0 %v585
        %v1168 = vpop.f32.mrb[0].mxu0
        %v1169 = vadd.f32 %v380, %v1168
        %v1170 = vpop.f32.mrb[0].mxu0
        %1171 = vmatprep.mubr.f32.mxu0 0.0
        %1172 = vmatmul.mubr.f32.gmra.mrb[0].mxu0 %v588
        %v1173 = vpop.f32.mrb[0].mxu0
        %v1174 = vadd.f32 %v380, %v1173
        %v1175 = vpop.f32.mrb[0].mxu0
        %1176 = vmatprep.mubr.f32.mxu0 0.0
        %1177 = vmatmul.mubr.f32.gmra.mrb[0].mxu0 %v591
        %v1178 = vpop.f32.mrb[0].mxu0
        %v1179 = vadd.f32 %v380, %v1178
        %v1180 = vpop.f32.mrb[0].mxu0
        %1181 = vmatprep.mubr.f32.mxu0 0.0
        %1182 = vmatmul.mubr.f32.gmra.mrb[0].mxu0 %v594
        %v1183 = vpop.f32.mrb[0].mxu0
        %v1184 = vadd.f32 %v380, %v1183
        %v1185 = vpop.f32.mrb[0].mxu0
        %1186 = vmatprep.mubr.f32.mxu0 0.0
        %1187 = vmatmul.mubr.f32.gmra.mrb[0].mxu0 %v597
        %v1188 = vpop.f32.mrb[0].mxu0
        %v1189 = vadd.f32 %v380, %v1188
        %v1190 = vpop.f32.mrb[0].mxu0
        %1191 = vmatprep.mubr.f32.mxu0 0.0
        %1192 = vmatmul.mubr.f32.gmra.mrb[0].mxu0 %v600
        %v1193 = vpop.f32.mrb[0].mxu0
        %v1194 = vadd.f32 %v380, %v1193
        %v1195 = vpop.f32.mrb[0].mxu0
        %1196 = vmatprep.mubr.f32.mxu0 0.0
        %1197 = vmatmul.mubr.f32.gmra.mrb[0].mxu0 %v603
        %v1198 = vpop.f32.mrb[0].mxu0
        %v1199 = vadd.f32 %v380, %v1198
        %v1200 = vpop.f32.mrb[0].mxu0
        %1201 = vmatprep.mubr.f32.mxu0 0.0
        %1202 = vmatmul.mubr.f32.gmra.mrb[0].mxu0 %v606
        %v1203 = vpop.f32.mrb[0].mxu0
        %v1204 = vadd.f32 %v380, %v1203
        %v1205 = vpop.f32.mrb[0].mxu0
        %1206 = vmatprep.mubr.f32.mxu0 0.0
        %1207 = vmatmul.mubr.f32.gmra.mrb[0].mxu0 %v609
        %v1208 = vpop.f32.mrb[0].mxu0
        %v1209 = vadd.f32 %v380, %v1208
        %v1210 = vpop.f32.mrb[0].mxu0
        %1211 = vmatprep.mubr.f32.mxu0 0.0
        %1212 = vmatmul.mubr.f32.gmra.mrb[0].mxu0 %v612
        %v1213 = vpop.f32.mrb[0].mxu0
        %v1214 = vadd.f32 %v380, %v1213
        %v1215 = vpop.f32.mrb[0].mxu0
        %1216 = vmatprep.mubr.f32.mxu0 0.0
        %1217 = vmatmul.mubr.f32.gmra.mrb[0].mxu0 %v615
        %v1218 = vpop.f32.mrb[0].mxu0
        %v1219 = vadd.f32 %v380, %v1218
        %v1220 = vpop.f32.mrb[0].mxu0
        %1221 = vmatprep.mubr.f32.mxu0 0.0
        %1222 = vmatmul.mubr.f32.gmra.mrb[0].mxu0 %v618
        %v1223 = vpop.f32.mrb[0].mxu0
        %v1224 = vadd.f32 %v380, %v1223
        %v1225 = vpop.f32.mrb[0].mxu0
        %1226 = vmatprep.mubr.f32.mxu0 0.0
        %1227 = vmatmul.mubr.f32.gmra.mrb[0].mxu0 %v621
        %v1228 = vpop.f32.mrb[0].mxu0
        %v1229 = vadd.f32 %v380, %v1228
        %v1230 = vpop.f32.mrb[0].mxu0
        %1231 = vmatprep.mubr.f32.mxu0 0.0
        %1232 = vmatmul.mubr.f32.gmra.mrb[0].mxu0 %v624
        %v1233 = vpop.f32.mrb[0].mxu0
        %v1234 = vadd.f32 %v380, %v1233
        %v1235 = vpop.f32.mrb[0].mxu0
        %1236 = vmatprep.mubr.f32.mxu0 0.0
        %1237 = vmatmul.mubr.f32.gmra.mrb[0].mxu0 %v627
        %v1238 = vpop.f32.mrb[0].mxu0
        %v1239 = vadd.f32 %v380, %v1238
        %v1240 = vpop.f32.mrb[0].mxu0
        %1241 = vmatprep.mubr.f32.mxu0 0.0
        %1242 = vmatmul.mubr.f32.gmra.mrb[0].mxu0 %v630
        %v1243 = vpop.f32.mrb[0].mxu0
        %v1244 = vadd.f32 %v380, %v1243
        %v1245 = vpop.f32.mrb[0].mxu0
        %1246 = vmatprep.mubr.f32.mxu0 0.0
        %1247 = vmatmul.mubr.f32.gmra.mrb[0].mxu0 %v633
        %v1248 = vpop.f32.mrb[0].mxu0
        %v1249 = vadd.f32 %v380, %v1248
        %v1250 = vpop.f32.mrb[0].mxu0
        %1251 = vmatprep.mubr.f32.mxu0 0.0
        %1252 = vmatmul.mubr.f32.gmra.mrb[0].mxu0 %v636
        %v1253 = vpop.f32.mrb[0].mxu0
        %v1254 = vadd.f32 %v380, %v1253
        %v1255 = vpop.f32.mrb[0].mxu0
        %1256 = vmatprep.mubr.f32.mxu0 0.0
        %1257 = vmatmul.mubr.f32.gmra.mrb[0].mxu0 %v639
        %v1258 = vpop.f32.mrb[0].mxu0
        %v1259 = vadd.f32 %v380, %v1258
        %v1260 = vpop.f32.mrb[0].mxu0
        %1261 = vmatprep.mubr.f32.mxu0 0.0
        %1262 = vmatmul.mubr.f32.gmra.mrb[0].mxu0 %v642
        %v1263 = vpop.f32.mrb[0].mxu0
        %v1264 = vadd.f32 %v380, %v1263
        %v1265 = vpop.f32.mrb[0].mxu0
        %1266 = vmatprep.mubr.f32.mxu0 0.0
        %1267 = vmatmul.mubr.f32.gmra.mrb[0].mxu0 %v645
        %v1268 = vpop.f32.mrb[0].mxu0
        %v1269 = vadd.f32 %v380, %v1268
        %v1270 = vpop.f32.mrb[0].mxu0
        %1271 = vmatprep.mubr.f32.mxu0 0.0
        %1272 = vmatmul.mubr.f32.gmra.mrb[0].mxu0 %v648
        %v1273 = vpop.f32.mrb[0].mxu0
        %v1274 = vadd.f32 %v380, %v1273
        %v1275 = vpop.f32.mrb[0].mxu0
        %1276 = vmatprep.mubr.f32.mxu0 0.0
        %1277 = vmatmul.mubr.f32.gmra.mrb[0].mxu0 %v651
        %v1278 = vpop.f32.mrb[0].mxu0
        %v1279 = vadd.f32 %v380, %v1278
        %v1280 = vpop.f32.mrb[0].mxu0
        %1281 = vmatprep.mubr.f32.mxu0 0.0
        %1282 = vmatmul.mubr.f32.gmra.mrb[0].mxu0 %v654
        %v1283 = vpop.f32.mrb[0].mxu0
        %v1284 = vadd.f32 %v380, %v1283
        %v1285 = vpop.f32.mrb[0].mxu0
        %1286 = vmatprep.mubr.f32.mxu0 0.0
        %1287 = vmatmul.mubr.f32.gmra.mrb[0].mxu0 %v657
        %v1288 = vpop.f32.mrb[0].mxu0
        %v1289 = vadd.f32 %v380, %v1288
        %v1290 = vpop.f32.mrb[0].mxu0
        %1291 = vmatprep.mubr.f32.mxu0 0.0
        %1292 = vmatmul.mubr.f32.gmra.mrb[0].mxu0 %v660
        %v1293 = vpop.f32.mrb[0].mxu0
        %v1294 = vadd.f32 %v380, %v1293
        %v1295 = vpop.f32.mrb[0].mxu0
        %1296 = vmatprep.mubr.f32.mxu0 0.0
        %1297 = vmatmul.mubr.f32.gmra.mrb[0].mxu0 %v663
        %v1298 = vpop.f32.mrb[0].mxu0
        %v1299 = vadd.f32 %v380, %v1298
        %v1300 = vpop.f32.mrb[0].mxu0
        %1301 = vmatprep.mubr.f32.mxu0 0.0
        %1302 = vmatmul.mubr.f32.gmra.mrb[0].mxu0 %v666
        %v1303 = vpop.f32.mrb[0].mxu0
        %v1304 = vadd.f32 %v380, %v1303
        %v1305 = vpop.f32.mrb[0].mxu0
        %1306 = vmatprep.mubr.f32.mxu0 0.0
        %1307 = vmatmul.mubr.f32.gmra.mrb[0].mxu0 %v669
        %v1308 = vpop.f32.mrb[0].mxu0
        %v1309 = vadd.f32 %v380, %v1308
        %v1310 = vpop.f32.mrb[0].mxu0
        %1311 = vmatprep.mubr.f32.mxu0 0.0
        %1312 = vmatmul.mubr.f32.gmra.mrb[0].mxu0 %v672
        %v1313 = vpop.f32.mrb[0].mxu0
        %v1314 = vadd.f32 %v380, %v1313
        %v1315 = vpop.f32.mrb[0].mxu0
        %1316 = vmatprep.mubr.f32.mxu0 0.0
        %1317 = vmatmul.mubr.f32.gmra.mrb[0].mxu0 %v675
        %v1318 = vpop.f32.mrb[0].mxu0
        %v1319 = vadd.f32 %v380, %v1318
        %v1320 = vpop.f32.mrb[0].mxu0
        %1321 = vmatprep.mubr.f32.mxu0 0.0
        %1322 = vmatmul.mubr.f32.gmra.mrb[0].mxu0 %v678
        %v1323 = vpop.f32.mrb[0].mxu0
        %v1324 = vadd.f32 %v380, %v1323
        %v1325 = vpop.f32.mrb[0].mxu0
        %1326 = vmatprep.mubr.f32.mxu0 0.0
        %1327 = vmatmul.mubr.f32.gmra.mrb[0].mxu0 %v681
        %v1328 = vpop.f32.mrb[0].mxu0
        %v1329 = vadd.f32 %v380, %v1328
        %v1330 = vpop.f32.mrb[0].mxu0
        %1331 = vmatprep.mubr.f32.mxu0 0.0
        %1332 = vmatmul.mubr.f32.gmra.mrb[0].mxu0 %v684
        %v1333 = vpop.f32.mrb[0].mxu0
        %v1334 = vadd.f32 %v380, %v1333
        %v1335 = vpop.f32.mrb[0].mxu0
        %1336 = vmatprep.mubr.f32.mxu0 0.0
        %1337 = vmatmul.mubr.f32.gmra.mrb[0].mxu0 %v687
        %v1338 = vpop.f32.mrb[0].mxu0
        %v1339 = vadd.f32 %v380, %v1338
        %v1340 = vpop.f32.mrb[0].mxu0
        %1341 = vmatprep.mubr.f32.mxu0 0.0
        %1342 = vmatmul.mubr.f32.gmra.mrb[0].mxu0 %v690
        %v1343 = vpop.f32.mrb[0].mxu0
        %v1344 = vadd.f32 %v380, %v1343
        %v1345 = vpop.f32.mrb[0].mxu0
        %1346 = vmatprep.mubr.f32.mxu0 0.0
        %1347 = vmatmul.mubr.f32.gmra.mrb[0].mxu0 %v693
        %v1348 = vpop.f32.mrb[0].mxu0
        %v1349 = vadd.f32 %v380, %v1348
        %v1350 = vpop.f32.mrb[0].mxu0
        %1351 = vmatprep.mubr.f32.mxu0 0.0
        %1352 = vmatmul.mubr.f32.gmra.mrb[0].mxu0 %v696
        %v1353 = vpop.f32.mrb[0].mxu0
        %v1354 = vadd.f32 %v380, %v1353
        %v1355 = vpop.f32.mrb[0].mxu0
        %1356 = vmatprep.mubr.f32.mxu0 0.0
        %1357 = vmatmul.mubr.f32.gmra.mrb[0].mxu0 %v699
        %v1358 = vpop.f32.mrb[0].mxu0
        %v1359 = vadd.f32 %v380, %v1358
        %v1360 = vpop.f32.mrb[0].mxu0
        %1361 = vmatprep.mubr.f32.mxu0 0.0
        %1362 = vmatmul.mubr.f32.gmra.mrb[0].mxu0 %v702
        %v1363 = vpop.f32.mrb[0].mxu0
        %v1364 = vadd.f32 %v380, %v1363
        %v1365 = vpop.f32.mrb[0].mxu0
        %1366 = vmatprep.mubr.f32.mxu0 0.0
        %1367 = vmatmul.mubr.f32.gmra.mrb[0].mxu0 %v705
        %v1368 = vpop.f32.mrb[0].mxu0
        %v1369 = vadd.f32 %v380, %v1368
        %v1370 = vpop.f32.mrb[0].mxu0
        %1371 = vmatprep.mubr.f32.mxu0 0.0
        %1372 = vmatmul.mubr.f32.gmra.mrb[0].mxu0 %v708
        %v1373 = vpop.f32.mrb[0].mxu0
        %v1374 = vadd.f32 %v380, %v1373
        %v1375 = vpop.f32.mrb[0].mxu0
        %1376 = vmatprep.mubr.f32.mxu0 0.0
        %1377 = vmatmul.mubr.f32.gmra.mrb[0].mxu0 %v711
        %v1378 = vpop.f32.mrb[0].mxu0
        %v1379 = vadd.f32 %v380, %v1378
        %v1380 = vpop.f32.mrb[0].mxu0
        %1381 = vmatprep.mubr.f32.mxu0 0.0
        %1382 = vmatmul.mubr.f32.gmra.mrb[0].mxu0 %v714
        %v1383 = vpop.f32.mrb[0].mxu0
        %v1384 = vadd.f32 %v380, %v1383
        %v1385 = vpop.f32.mrb[0].mxu0
        %1386 = vmatprep.mubr.f32.mxu0 0.0
        %1387 = vmatmul.mubr.f32.gmra.mrb[0].mxu0 %v717
        %v1388 = vpop.f32.mrb[0].mxu0
        %v1389 = vadd.f32 %v380, %v1388
        %v1390 = vpop.f32.mrb[0].mxu0
        %1391 = vmatprep.mubr.f32.mxu0 0.0
        %1392 = vmatmul.mubr.f32.gmra.mrb[0].mxu0 %v720
        %v1393 = vpop.f32.mrb[0].mxu0
        %v1394 = vadd.f32 %v380, %v1393
        %v1395 = vpop.f32.mrb[0].mxu0
        %1396 = vmatprep.mubr.f32.mxu0 0.0
        %1397 = vmatmul.mubr.f32.gmra.mrb[0].mxu0 %v723
        %v1398 = vpop.f32.mrb[0].mxu0
        %v1399 = vadd.f32 %v380, %v1398
        %v1400 = vpop.f32.mrb[0].mxu0
        %1401 = vmatprep.mubr.f32.mxu0 0.0
        %1402 = vmatmul.mubr.f32.gmra.mrb[0].mxu0 %v726
        %v1403 = vpop.f32.mrb[0].mxu0
        %v1404 = vadd.f32 %v380, %v1403
        %v1405 = vpop.f32.mrb[0].mxu0
        %1406 = vmatprep.mubr.f32.mxu0 0.0
        %1407 = vmatmul.mubr.f32.gmra.mrb[0].mxu0 %v729
        %v1408 = vpop.f32.mrb[0].mxu0
        %v1409 = vadd.f32 %v380, %v1408
        %v1410 = vpop.f32.mrb[0].mxu0
        %1411 = vmatprep.mubr.f32.mxu0 0.0
        %1412 = vmatmul.mubr.f32.gmra.mrb[0].mxu0 %v732
        %v1413 = vpop.f32.mrb[0].mxu0
        %v1414 = vadd.f32 %v380, %v1413
        %v1415 = vpop.f32.mrb[0].mxu0
        %1416 = vmatprep.mubr.f32.mxu0 0.0
        %1417 = vmatmul.mubr.f32.gmra.mrb[0].mxu0 %v735
        %v1418 = vpop.f32.mrb[0].mxu0
        %v1419 = vadd.f32 %v380, %v1418
        %v1420 = vpop.f32.mrb[0].mxu0
        %1421 = vmatprep.mubr.f32.mxu0 0.0
        %1422 = vmatmul.mubr.f32.gmra.mrb[0].mxu0 %v738
        %v1423 = vpop.f32.mrb[0].mxu0
        %v1424 = vadd.f32 %v380, %v1423
        %v1425 = vpop.f32.mrb[0].mxu0
        %1426 = vmatprep.mubr.f32.mxu0 0.0
        %1427 = vmatmul.mubr.f32.gmra.mrb[0].mxu0 %v741
        %v1428 = vpop.f32.mrb[0].mxu0
        %v1429 = vadd.f32 %v380, %v1428
        %v1430 = vpop.f32.mrb[0].mxu0
        %1431 = vmatprep.mubr.f32.mxu0 0.0
        %1432 = vmatmul.mubr.f32.gmra.mrb[0].mxu0 %v744
        %v1433 = vpop.f32.mrb[0].mxu0
        %v1434 = vadd.f32 %v380, %v1433
        %v1435 = vpop.f32.mrb[0].mxu0
        %1436 = vmatprep.mubr.f32.mxu0 0.0
        %1437 = vmatmul.mubr.f32.gmra.mrb[0].mxu0 %v747
        %v1438 = vpop.f32.mrb[0].mxu0
        %v1439 = vadd.f32 %v380, %v1438
        %v1440 = vpop.f32.mrb[0].mxu0
        %1441 = vmatprep.mubr.f32.mxu0 0.0
        %1442 = vmatmul.mubr.f32.gmra.mrb[0].mxu0 %v750
        %v1443 = vpop.f32.mrb[0].mxu0
        %v1444 = vadd.f32 %v380, %v1443
        %v1445 = vpop.f32.mrb[0].mxu0
        %1446 = vmatprep.mubr.f32.mxu0 0.0
        %1447 = vmatmul.mubr.f32.gmra.mrb[0].mxu0 %v753
        %v1448 = vpop.f32.mrb[0].mxu0
        %v1449 = vadd.f32 %v380, %v1448
        %v1450 = vpop.f32.mrb[0].mxu0
        %1451 = vmatprep.mubr.f32.mxu0 0.0
        %1452 = vmatmul.mubr.f32.gmra.mrb[0].mxu0 %v756
        %v1453 = vpop.f32.mrb[0].mxu0
        %v1454 = vadd.f32 %v380, %v1453
        %v1455 = vpop.f32.mrb[0].mxu0
        %1456 = vmatprep.mubr.f32.mxu0 0.0
        %1457 = vmatmul.mubr.f32.gmra.mrb[0].mxu0 %v759
        %v1458 = vpop.f32.mrb[0].mxu0
        %v1459 = vadd.f32 %v380, %v1458
        %v1460 = vpop.f32.mrb[0].mxu0
        %1461 = vmatprep.mubr.f32.mxu0 0.0
        %1462 = vmatmul.mubr.f32.gmra.mrb[0].mxu0 %v762
        %v1463 = vpop.f32.mrb[0].mxu0
        %v1464 = vadd.f32 %v380, %v1463
        %v1465 = vpop.f32.mrb[0].mxu0
        %1466 = vmatprep.mubr.f32.mxu0 0.0
        %1467 = vmatmul.mubr.f32.gmra.mrb[0].mxu0 %v765
        %v1468 = vpop.f32.mrb[0].mxu0
        %v1469 = vadd.f32 %v380, %v1468
        %v1470 = vpop.f32.mrb[0].mxu0
        %1471 = vdwg.mxu0
        %vm1472 = vcmp.ge.f32.partialorder %v834, 0.0
        %vm1473 = vcmp.ge.f32.partialorder %v839, 0.0
        %vm1474 = vcmp.ge.f32.partialorder %v844, 0.0
        %vm1475 = vcmp.ge.f32.partialorder %v849, 0.0
        %vm1476 = vcmp.ge.f32.partialorder %v854, 0.0
        %vm1477 = vcmp.ge.f32.partialorder %v859, 0.0
        %vm1478 = vcmp.ge.f32.partialorder %v864, 0.0
        %vm1479 = vcmp.ge.f32.partialorder %v869, 0.0
        %vm1480 = vcmp.ge.f32.partialorder %v874, 0.0
        %vm1481 = vcmp.ge.f32.partialorder %v879, 0.0
        %vm1482 = vcmp.ge.f32.partialorder %v884, 0.0
        %vm1483 = vcmp.ge.f32.partialorder %v889, 0.0
        %vm1484 = vcmp.ge.f32.partialorder %v894, 0.0
        %vm1485 = vcmp.ge.f32.partialorder %v899, 0.0
        %vm1486 = vcmp.ge.f32.partialorder %v904, 0.0
        %vm1487 = vcmp.ge.f32.partialorder %v909, 0.0
        %vm1488 = vcmp.ge.f32.partialorder %v914, 0.0
        %vm1489 = vcmp.ge.f32.partialorder %v919, 0.0
        %vm1490 = vcmp.ge.f32.partialorder %v924, 0.0
        %vm1491 = vcmp.ge.f32.partialorder %v929, 0.0
        %vm1492 = vcmp.ge.f32.partialorder %v934, 0.0
        %vm1493 = vcmp.ge.f32.partialorder %v939, 0.0
        %vm1494 = vcmp.ge.f32.partialorder %v944, 0.0
        %vm1495 = vcmp.ge.f32.partialorder %v949, 0.0
        %vm1496 = vcmp.ge.f32.partialorder %v954, 0.0
        %vm1497 = vcmp.ge.f32.partialorder %v959, 0.0
        %vm1498 = vcmp.ge.f32.partialorder %v964, 0.0
        %vm1499 = vcmp.ge.f32.partialorder %v969, 0.0
        %vm1500 = vcmp.ge.f32.partialorder %v974, 0.0
        %vm1501 = vcmp.ge.f32.partialorder %v979, 0.0
        %vm1502 = vcmp.ge.f32.partialorder %v984, 0.0
        %vm1503 = vcmp.ge.f32.partialorder %v989, 0.0
        %vm1504 = vcmp.ge.f32.partialorder %v994, 0.0
        %vm1505 = vcmp.ge.f32.partialorder %v999, 0.0
        %vm1506 = vcmp.ge.f32.partialorder %v1004, 0.0
        %vm1507 = vcmp.ge.f32.partialorder %v1009, 0.0
        %vm1508 = vcmp.ge.f32.partialorder %v1014, 0.0
        %vm1509 = vcmp.ge.f32.partialorder %v1019, 0.0
        %vm1510 = vcmp.ge.f32.partialorder %v1024, 0.0
        %vm1511 = vcmp.ge.f32.partialorder %v1029, 0.0
        %vm1512 = vcmp.ge.f32.partialorder %v1034, 0.0
        %vm1513 = vcmp.ge.f32.partialorder %v1039, 0.0
        %vm1514 = vcmp.ge.f32.partialorder %v1044, 0.0
        %vm1515 = vcmp.ge.f32.partialorder %v1049, 0.0
        %vm1516 = vcmp.ge.f32.partialorder %v1054, 0.0
        %vm1517 = vcmp.ge.f32.partialorder %v1059, 0.0
        %vm1518 = vcmp.ge.f32.partialorder %v1064, 0.0
        %vm1519 = vcmp.ge.f32.partialorder %v1069, 0.0
        %vm1520 = vcmp.ge.f32.partialorder %v1074, 0.0
        %vm1521 = vcmp.ge.f32.partialorder %v1079, 0.0
        %vm1522 = vcmp.ge.f32.partialorder %v1084, 0.0
        %vm1523 = vcmp.ge.f32.partialorder %v1089, 0.0
        %vm1524 = vcmp.ge.f32.partialorder %v1094, 0.0
        %vm1525 = vcmp.ge.f32.partialorder %v1099, 0.0
        %vm1526 = vcmp.ge.f32.partialorder %v1104, 0.0
        %vm1527 = vcmp.ge.f32.partialorder %v1109, 0.0
        %vm1528 = vcmp.ge.f32.partialorder %v1114, 0.0
        %vm1529 = vcmp.ge.f32.partialorder %v1119, 0.0
        %vm1530 = vcmp.ge.f32.partialorder %v1124, 0.0
        %vm1531 = vcmp.ge.f32.partialorder %v1129, 0.0
        %vm1532 = vcmp.ge.f32.partialorder %v1134, 0.0
        %vm1533 = vcmp.ge.f32.partialorder %v1139, 0.0
        %vm1534 = vcmp.ge.f32.partialorder %v1144, 0.0
        %vm1535 = vcmp.ge.f32.partialorder %v1149, 0.0
        %vm1536 = vcmp.ge.f32.partialorder %v1154, 0.0
        %vm1537 = vcmp.ge.f32.partialorder %v1159, 0.0
        %vm1538 = vcmp.ge.f32.partialorder %v1164, 0.0
        %vm1539 = vcmp.ge.f32.partialorder %v1169, 0.0
        %vm1540 = vcmp.ge.f32.partialorder %v1174, 0.0
        %vm1541 = vcmp.ge.f32.partialorder %v1179, 0.0
        %vm1542 = vcmp.ge.f32.partialorder %v1184, 0.0
        %vm1543 = vcmp.ge.f32.partialorder %v1189, 0.0
        %vm1544 = vcmp.ge.f32.partialorder %v1194, 0.0
        %vm1545 = vcmp.ge.f32.partialorder %v1199, 0.0
        %vm1546 = vcmp.ge.f32.partialorder %v1204, 0.0
        %vm1547 = vcmp.ge.f32.partialorder %v1209, 0.0
        %vm1548 = vcmp.ge.f32.partialorder %v1214, 0.0
        %vm1549 = vcmp.ge.f32.partialorder %v1219, 0.0
        %vm1550 = vcmp.ge.f32.partialorder %v1224, 0.0
        %vm1551 = vcmp.ge.f32.partialorder %v1229, 0.0
        %vm1552 = vcmp.ge.f32.partialorder %v1234, 0.0
        %vm1553 = vcmp.ge.f32.partialorder %v1239, 0.0
        %vm1554 = vcmp.ge.f32.partialorder %v1244, 0.0
        %vm1555 = vcmp.ge.f32.partialorder %v1249, 0.0
        %vm1556 = vcmp.ge.f32.partialorder %v1254, 0.0
        %vm1557 = vcmp.ge.f32.partialorder %v1259, 0.0
        %vm1558 = vcmp.ge.f32.partialorder %v1264, 0.0
        %vm1559 = vcmp.ge.f32.partialorder %v1269, 0.0
        %vm1560 = vcmp.ge.f32.partialorder %v1274, 0.0
        %vm1561 = vcmp.ge.f32.partialorder %v1279, 0.0
        %vm1562 = vcmp.ge.f32.partialorder %v1284, 0.0
        %vm1563 = vcmp.ge.f32.partialorder %v1289, 0.0
        %vm1564 = vcmp.ge.f32.partialorder %v1294, 0.0
        %vm1565 = vcmp.ge.f32.partialorder %v1299, 0.0
        %vm1566 = vcmp.ge.f32.partialorder %v1304, 0.0
        %vm1567 = vcmp.ge.f32.partialorder %v1309, 0.0
        %vm1568 = vcmp.ge.f32.partialorder %v1314, 0.0
        %vm1569 = vcmp.ge.f32.partialorder %v1319, 0.0
        %vm1570 = vcmp.ge.f32.partialorder %v1324, 0.0
        %vm1571 = vcmp.ge.f32.partialorder %v1329, 0.0
        %vm1572 = vcmp.ge.f32.partialorder %v1334, 0.0
        %vm1573 = vcmp.ge.f32.partialorder %v1339, 0.0
        %vm1574 = vcmp.ge.f32.partialorder %v1344, 0.0
        %vm1575 = vcmp.ge.f32.partialorder %v1349, 0.0
        %vm1576 = vcmp.ge.f32.partialorder %v1354, 0.0
        %vm1577 = vcmp.ge.f32.partialorder %v1359, 0.0
        %vm1578 = vcmp.ge.f32.partialorder %v1364, 0.0
        %vm1579 = vcmp.ge.f32.partialorder %v1369, 0.0
        %vm1580 = vcmp.ge.f32.partialorder %v1374, 0.0
        %vm1581 = vcmp.ge.f32.partialorder %v1379, 0.0
        %vm1582 = vcmp.ge.f32.partialorder %v1384, 0.0
        %vm1583 = vcmp.ge.f32.partialorder %v1389, 0.0
        %vm1584 = vcmp.ge.f32.partialorder %v1394, 0.0
        %vm1585 = vcmp.ge.f32.partialorder %v1399, 0.0
        %vm1586 = vcmp.ge.f32.partialorder %v1404, 0.0
        %vm1587 = vcmp.ge.f32.partialorder %v1409, 0.0
        %vm1588 = vcmp.ge.f32.partialorder %v1414, 0.0
        %vm1589 = vcmp.ge.f32.partialorder %v1419, 0.0
        %vm1590 = vcmp.ge.f32.partialorder %v1424, 0.0
        %vm1591 = vcmp.ge.f32.partialorder %v1429, 0.0
        %vm1592 = vcmp.ge.f32.partialorder %v1434, 0.0
        %vm1593 = vcmp.ge.f32.partialorder %v1439, 0.0
        %vm1594 = vcmp.ge.f32.partialorder %v1444, 0.0
        %vm1595 = vcmp.ge.f32.partialorder %v1449, 0.0
        %vm1596 = vcmp.ge.f32.partialorder %v1454, 0.0
        %vm1597 = vcmp.ge.f32.partialorder %v1459, 0.0
        %vm1598 = vcmp.ge.f32.partialorder %v1464, 0.0
        %vm1599 = vcmp.ge.f32.partialorder %v1469, 0.0
        %v1600 = vstv %s238
        %v1601 = vmul.f32 %v1600, %v834
        %v1602 = vmul.f32 %v1600, %v839
        %v1603 = vmul.f32 %v1600, %v844
        %v1604 = vmul.f32 %v1600, %v849
        %v1605 = vmul.f32 %v1600, %v854
        %v1606 = vmul.f32 %v1600, %v859
        %v1607 = vmul.f32 %v1600, %v864
        %v1608 = vmul.f32 %v1600, %v869
        %v1609 = vmul.f32 %v1600, %v874
        %v1610 = vmul.f32 %v1600, %v879
        %v1611 = vmul.f32 %v1600, %v884
        %v1612 = vmul.f32 %v1600, %v889
        %v1613 = vmul.f32 %v1600, %v894
        %v1614 = vmul.f32 %v1600, %v899
        %v1615 = vmul.f32 %v1600, %v904
        %v1616 = vmul.f32 %v1600, %v909
        %v1617 = vmul.f32 %v1600, %v914
        %v1618 = vmul.f32 %v1600, %v919
        %v1619 = vmul.f32 %v1600, %v924
        %v1620 = vmul.f32 %v1600, %v929
        %v1621 = vmul.f32 %v1600, %v934
        %v1622 = vmul.f32 %v1600, %v939
        %v1623 = vmul.f32 %v1600, %v944
        %v1624 = vmul.f32 %v1600, %v949
        %v1625 = vmul.f32 %v1600, %v954
        %v1626 = vmul.f32 %v1600, %v959
        %v1627 = vmul.f32 %v1600, %v964
        %v1628 = vmul.f32 %v1600, %v969
        %v1629 = vmul.f32 %v1600, %v974
        %v1630 = vmul.f32 %v1600, %v979
        %v1631 = vmul.f32 %v1600, %v984
        %v1632 = vmul.f32 %v1600, %v989
        %v1633 = vmul.f32 %v1600, %v994
        %v1634 = vmul.f32 %v1600, %v999
        %v1635 = vmul.f32 %v1600, %v1004
        %v1636 = vmul.f32 %v1600, %v1009
        %v1637 = vmul.f32 %v1600, %v1014
        %v1638 = vmul.f32 %v1600, %v1019
        %v1639 = vmul.f32 %v1600, %v1024
        %v1640 = vmul.f32 %v1600, %v1029
        %v1641 = vmul.f32 %v1600, %v1034
        %v1642 = vmul.f32 %v1600, %v1039
        %v1643 = vmul.f32 %v1600, %v1044
        %v1644 = vmul.f32 %v1600, %v1049
        %v1645 = vmul.f32 %v1600, %v1054
        %v1646 = vmul.f32 %v1600, %v1059
        %v1647 = vmul.f32 %v1600, %v1064
        %v1648 = vmul.f32 %v1600, %v1069
        %v1649 = vmul.f32 %v1600, %v1074
        %v1650 = vmul.f32 %v1600, %v1079
        %v1651 = vmul.f32 %v1600, %v1084
        %v1652 = vmul.f32 %v1600, %v1089
        %v1653 = vmul.f32 %v1600, %v1094
        %v1654 = vmul.f32 %v1600, %v1099
        %v1655 = vmul.f32 %v1600, %v1104
        %v1656 = vmul.f32 %v1600, %v1109
        %v1657 = vmul.f32 %v1600, %v1114
        %v1658 = vmul.f32 %v1600, %v1119
        %v1659 = vmul.f32 %v1600, %v1124
        %v1660 = vmul.f32 %v1600, %v1129
        %v1661 = vmul.f32 %v1600, %v1134
        %v1662 = vmul.f32 %v1600, %v1139
        %v1663 = vmul.f32 %v1600, %v1144
        %v1664 = vmul.f32 %v1600, %v1149
        %v1665 = vmul.f32 %v1600, %v1154
        %v1666 = vmul.f32 %v1600, %v1159
        %v1667 = vmul.f32 %v1600, %v1164
        %v1668 = vmul.f32 %v1600, %v1169
        %v1669 = vmul.f32 %v1600, %v1174
        %v1670 = vmul.f32 %v1600, %v1179
        %v1671 = vmul.f32 %v1600, %v1184
        %v1672 = vmul.f32 %v1600, %v1189
        %v1673 = vmul.f32 %v1600, %v1194
        %v1674 = vmul.f32 %v1600, %v1199
        %v1675 = vmul.f32 %v1600, %v1204
        %v1676 = vmul.f32 %v1600, %v1209
        %v1677 = vmul.f32 %v1600, %v1214
        %v1678 = vmul.f32 %v1600, %v1219
        %v1679 = vmul.f32 %v1600, %v1224
        %v1680 = vmul.f32 %v1600, %v1229
        %v1681 = vmul.f32 %v1600, %v1234
        %v1682 = vmul.f32 %v1600, %v1239
        %v1683 = vmul.f32 %v1600, %v1244
        %v1684 = vmul.f32 %v1600, %v1249
        %v1685 = vmul.f32 %v1600, %v1254
        %v1686 = vmul.f32 %v1600, %v1259
        %v1687 = vmul.f32 %v1600, %v1264
        %v1688 = vmul.f32 %v1600, %v1269
        %v1689 = vmul.f32 %v1600, %v1274
        %v1690 = vmul.f32 %v1600, %v1279
        %v1691 = vmul.f32 %v1600, %v1284
        %v1692 = vmul.f32 %v1600, %v1289
        %v1693 = vmul.f32 %v1600, %v1294
        %v1694 = vmul.f32 %v1600, %v1299
        %v1695 = vmul.f32 %v1600, %v1304
        %v1696 = vmul.f32 %v1600, %v1309
        %v1697 = vmul.f32 %v1600, %v1314
        %v1698 = vmul.f32 %v1600, %v1319
        %v1699 = vmul.f32 %v1600, %v1324
        %v1700 = vmul.f32 %v1600, %v1329
        %v1701 = vmul.f32 %v1600, %v1334
        %v1702 = vmul.f32 %v1600, %v1339
        %v1703 = vmul.f32 %v1600, %v1344
        %v1704 = vmul.f32 %v1600, %v1349
        %v1705 = vmul.f32 %v1600, %v1354
        %v1706 = vmul.f32 %v1600, %v1359
        %v1707 = vmul.f32 %v1600, %v1364
        %v1708 = vmul.f32 %v1600, %v1369
        %v1709 = vmul.f32 %v1600, %v1374
        %v1710 = vmul.f32 %v1600, %v1379
        %v1711 = vmul.f32 %v1600, %v1384
        %v1712 = vmul.f32 %v1600, %v1389
        %v1713 = vmul.f32 %v1600, %v1394
        %v1714 = vmul.f32 %v1600, %v1399
        %v1715 = vmul.f32 %v1600, %v1404
        %v1716 = vmul.f32 %v1600, %v1409
        %v1717 = vmul.f32 %v1600, %v1414
        %v1718 = vmul.f32 %v1600, %v1419
        %v1719 = vmul.f32 %v1600, %v1424
        %v1720 = vmul.f32 %v1600, %v1429
        %v1721 = vmul.f32 %v1600, %v1434
        %v1722 = vmul.f32 %v1600, %v1439
        %v1723 = vmul.f32 %v1600, %v1444
        %v1724 = vmul.f32 %v1600, %v1449
        %v1725 = vmul.f32 %v1600, %v1454
        %v1726 = vmul.f32 %v1600, %v1459
        %v1727 = vmul.f32 %v1600, %v1464
        %v1728 = vmul.f32 %v1600, %v1469
        %v1729 = vsel %vm1472, %v834, %v1601
        %v1730 = vsel %vm1473, %v839, %v1602
        %v1731 = vsel %vm1474, %v844, %v1603
        %v1732 = vsel %vm1475, %v849, %v1604
        %v1733 = vsel %vm1476, %v854, %v1605
        %v1734 = vsel %vm1477, %v859, %v1606
        %v1735 = vsel %vm1478, %v864, %v1607
        %v1736 = vsel %vm1479, %v869, %v1608
        %v1737 = vsel %vm1480, %v874, %v1609
        %v1738 = vsel %vm1481, %v879, %v1610
        %v1739 = vsel %vm1482, %v884, %v1611
        %v1740 = vsel %vm1483, %v889, %v1612
        %v1741 = vsel %vm1484, %v894, %v1613
        %v1742 = vsel %vm1485, %v899, %v1614
        %v1743 = vsel %vm1486, %v904, %v1615
        %v1744 = vsel %vm1487, %v909, %v1616
        %v1745 = vsel %vm1488, %v914, %v1617
        %v1746 = vsel %vm1489, %v919, %v1618
        %v1747 = vsel %vm1490, %v924, %v1619
        %v1748 = vsel %vm1491, %v929, %v1620
        %v1749 = vsel %vm1492, %v934, %v1621
        %v1750 = vsel %vm1493, %v939, %v1622
        %v1751 = vsel %vm1494, %v944, %v1623
        %v1752 = vsel %vm1495, %v949, %v1624
        %v1753 = vsel %vm1496, %v954, %v1625
        %v1754 = vsel %vm1497, %v959, %v1626
        %v1755 = vsel %vm1498, %v964, %v1627
        %v1756 = vsel %vm1499, %v969, %v1628
        %v1757 = vsel %vm1500, %v974, %v1629
        %v1758 = vsel %vm1501, %v979, %v1630
        %v1759 = vsel %vm1502, %v984, %v1631
        %v1760 = vsel %vm1503, %v989, %v1632
        %v1761 = vsel %vm1504, %v994, %v1633
        %v1762 = vsel %vm1505, %v999, %v1634
        %v1763 = vsel %vm1506, %v1004, %v1635
        %v1764 = vsel %vm1507, %v1009, %v1636
        %v1765 = vsel %vm1508, %v1014, %v1637
        %v1766 = vsel %vm1509, %v1019, %v1638
        %v1767 = vsel %vm1510, %v1024, %v1639
        %v1768 = vsel %vm1511, %v1029, %v1640
        %v1769 = vsel %vm1512, %v1034, %v1641
        %v1770 = vsel %vm1513, %v1039, %v1642
        %v1771 = vsel %vm1514, %v1044, %v1643
        %v1772 = vsel %vm1515, %v1049, %v1644
        %v1773 = vsel %vm1516, %v1054, %v1645
        %v1774 = vsel %vm1517, %v1059, %v1646
        %v1775 = vsel %vm1518, %v1064, %v1647
        %v1776 = vsel %vm1519, %v1069, %v1648
        %v1777 = vsel %vm1520, %v1074, %v1649
        %v1778 = vsel %vm1521, %v1079, %v1650
        %v1779 = vsel %vm1522, %v1084, %v1651
        %v1780 = vsel %vm1523, %v1089, %v1652
        %v1781 = vsel %vm1524, %v1094, %v1653
        %v1782 = vsel %vm1525, %v1099, %v1654
        %v1783 = vsel %vm1526, %v1104, %v1655
        %v1784 = vsel %vm1527, %v1109, %v1656
        %v1785 = vsel %vm1528, %v1114, %v1657
        %v1786 = vsel %vm1529, %v1119, %v1658
        %v1787 = vsel %vm1530, %v1124, %v1659
        %v1788 = vsel %vm1531, %v1129, %v1660
        %v1789 = vsel %vm1532, %v1134, %v1661
        %v1790 = vsel %vm1533, %v1139, %v1662
        %v1791 = vsel %vm1534, %v1144, %v1663
        %v1792 = vsel %vm1535, %v1149, %v1664
        %v1793 = vsel %vm1536, %v1154, %v1665
        %v1794 = vsel %vm1537, %v1159, %v1666
        %v1795 = vsel %vm1538, %v1164, %v1667
        %v1796 = vsel %vm1539, %v1169, %v1668
        %v1797 = vsel %vm1540, %v1174, %v1669
        %v1798 = vsel %vm1541, %v1179, %v1670
        %v1799 = vsel %vm1542, %v1184, %v1671
        %v1800 = vsel %vm1543, %v1189, %v1672
        %v1801 = vsel %vm1544, %v1194, %v1673
        %v1802 = vsel %vm1545, %v1199, %v1674
        %v1803 = vsel %vm1546, %v1204, %v1675
        %v1804 = vsel %vm1547, %v1209, %v1676
        %v1805 = vsel %vm1548, %v1214, %v1677
        %v1806 = vsel %vm1549, %v1219, %v1678
        %v1807 = vsel %vm1550, %v1224, %v1679
        %v1808 = vsel %vm1551, %v1229, %v1680
        %v1809 = vsel %vm1552, %v1234, %v1681
        %v1810 = vsel %vm1553, %v1239, %v1682
        %v1811 = vsel %vm1554, %v1244, %v1683
        %v1812 = vsel %vm1555, %v1249, %v1684
        %v1813 = vsel %vm1556, %v1254, %v1685
        %v1814 = vsel %vm1557, %v1259, %v1686
        %v1815 = vsel %vm1558, %v1264, %v1687
        %v1816 = vsel %vm1559, %v1269, %v1688
        %v1817 = vsel %vm1560, %v1274, %v1689
        %v1818 = vsel %vm1561, %v1279, %v1690
        %v1819 = vsel %vm1562, %v1284, %v1691
        %v1820 = vsel %vm1563, %v1289, %v1692
        %v1821 = vsel %vm1564, %v1294, %v1693
        %v1822 = vsel %vm1565, %v1299, %v1694
        %v1823 = vsel %vm1566, %v1304, %v1695
        %v1824 = vsel %vm1567, %v1309, %v1696
        %v1825 = vsel %vm1568, %v1314, %v1697
        %v1826 = vsel %vm1569, %v1319, %v1698
        %v1827 = vsel %vm1570, %v1324, %v1699
        %v1828 = vsel %vm1571, %v1329, %v1700
        %v1829 = vsel %vm1572, %v1334, %v1701
        %v1830 = vsel %vm1573, %v1339, %v1702
        %v1831 = vsel %vm1574, %v1344, %v1703
        %v1832 = vsel %vm1575, %v1349, %v1704
        %v1833 = vsel %vm1576, %v1354, %v1705
        %v1834 = vsel %vm1577, %v1359, %v1706
        %v1835 = vsel %vm1578, %v1364, %v1707
        %v1836 = vsel %vm1579, %v1369, %v1708
        %v1837 = vsel %vm1580, %v1374, %v1709
        %v1838 = vsel %vm1581, %v1379, %v1710
        %v1839 = vsel %vm1582, %v1384, %v1711
        %v1840 = vsel %vm1583, %v1389, %v1712
        %v1841 = vsel %vm1584, %v1394, %v1713
        %v1842 = vsel %vm1585, %v1399, %v1714
        %v1843 = vsel %vm1586, %v1404, %v1715
        %v1844 = vsel %vm1587, %v1409, %v1716
        %v1845 = vsel %vm1588, %v1414, %v1717
        %v1846 = vsel %vm1589, %v1419, %v1718
        %v1847 = vsel %vm1590, %v1424, %v1719
        %v1848 = vsel %vm1591, %v1429, %v1720
        %v1849 = vsel %vm1592, %v1434, %v1721
        %v1850 = vsel %vm1593, %v1439, %v1722
        %v1851 = vsel %vm1594, %v1444, %v1723
        %v1852 = vsel %vm1595, %v1449, %v1724
        %v1853 = vsel %vm1596, %v1454, %v1725
        %v1854 = vsel %vm1597, %v1459, %v1726
        %v1855 = vsel %vm1598, %v1464, %v1727
        %v1856 = vsel %vm1599, %v1469, %v1728
        %1857 = vst [vmem:[%s223] sm:$0xff] %v1729
        %1858 = vst [vmem:[%s223 + $0x8] sm:$0xff] %v1730
        %1859 = vst [vmem:[%s223 + $0x10] sm:$0xff] %v1731
        %1860 = vst [vmem:[%s223 + $0x18] sm:$0xff] %v1732
        %1861 = vst [vmem:[%s223 + $0x20] sm:$0xff] %v1733
        %1862 = vst [vmem:[%s223 + $0x28] sm:$0xff] %v1734
        %1863 = vst [vmem:[%s223 + $0x30] sm:$0xff] %v1735
        %1864 = vst [vmem:[%s223 + $0x38] sm:$0xff] %v1736
        %1865 = vst [vmem:[%s223 + $0x40] sm:$0xff] %v1737
        %1866 = vst [vmem:[%s223 + $0x48] sm:$0xff] %v1738
        %1867 = vst [vmem:[%s223 + $0x50] sm:$0xff] %v1739
        %1868 = vst [vmem:[%s223 + $0x58] sm:$0xff] %v1740
        %1869 = vst [vmem:[%s223 + $0x60] sm:$0xff] %v1741
        %1870 = vst [vmem:[%s223 + $0x68] sm:$0xff] %v1742
        %1871 = vst [vmem:[%s223 + $0x70] sm:$0xff] %v1743
        %1872 = vst [vmem:[%s223 + $0x78] sm:$0xff] %v1744
        %1873 = vst [vmem:[%s223 + $0x80] sm:$0xff] %v1745
        %1874 = vst [vmem:[%s223 + $0x88] sm:$0xff] %v1746
        %1875 = vst [vmem:[%s223 + $0x90] sm:$0xff] %v1747
        %1876 = vst [vmem:[%s223 + $0x98] sm:$0xff] %v1748
        %1877 = vst [vmem:[%s223 + $0xa0] sm:$0xff] %v1749
        %1878 = vst [vmem:[%s223 + $0xa8] sm:$0xff] %v1750
        %1879 = vst [vmem:[%s223 + $0xb0] sm:$0xff] %v1751
        %1880 = vst [vmem:[%s223 + $0xb8] sm:$0xff] %v1752
        %1881 = vst [vmem:[%s223 + $0xc0] sm:$0xff] %v1753
        %1882 = vst [vmem:[%s223 + $0xc8] sm:$0xff] %v1754
        %1883 = vst [vmem:[%s223 + $0xd0] sm:$0xff] %v1755
        %1884 = vst [vmem:[%s223 + $0xd8] sm:$0xff] %v1756
        %1885 = vst [vmem:[%s223 + $0xe0] sm:$0xff] %v1757
        %1886 = vst [vmem:[%s223 + $0xe8] sm:$0xff] %v1758
        %1887 = vst [vmem:[%s223 + $0xf0] sm:$0xff] %v1759
        %1888 = vst [vmem:[%s223 + $0xf8] sm:$0xff] %v1760
        %1889 = vst [vmem:[%s223 + $0x100] sm:$0xff] %v1761
        %1890 = vst [vmem:[%s223 + $0x108] sm:$0xff] %v1762
        %1891 = vst [vmem:[%s223 + $0x110] sm:$0xff] %v1763
        %1892 = vst [vmem:[%s223 + $0x118] sm:$0xff] %v1764
        %1893 = vst [vmem:[%s223 + $0x120] sm:$0xff] %v1765
        %1894 = vst [vmem:[%s223 + $0x128] sm:$0xff] %v1766
        %1895 = vst [vmem:[%s223 + $0x130] sm:$0xff] %v1767
        %1896 = vst [vmem:[%s223 + $0x138] sm:$0xff] %v1768
        %1897 = vst [vmem:[%s223 + $0x140] sm:$0xff] %v1769
        %1898 = vst [vmem:[%s223 + $0x148] sm:$0xff] %v1770
        %1899 = vst [vmem:[%s223 + $0x150] sm:$0xff] %v1771
        %1900 = vst [vmem:[%s223 + $0x158] sm:$0xff] %v1772
        %1901 = vst [vmem:[%s223 + $0x160] sm:$0xff] %v1773
        %1902 = vst [vmem:[%s223 + $0x168] sm:$0xff] %v1774
        %1903 = vst [vmem:[%s223 + $0x170] sm:$0xff] %v1775
        %1904 = vst [vmem:[%s223 + $0x178] sm:$0xff] %v1776
        %1905 = vst [vmem:[%s223 + $0x180] sm:$0xff] %v1777
        %1906 = vst [vmem:[%s223 + $0x188] sm:$0xff] %v1778
        %1907 = vst [vmem:[%s223 + $0x190] sm:$0xff] %v1779
        %1908 = vst [vmem:[%s223 + $0x198] sm:$0xff] %v1780
        %1909 = vst [vmem:[%s223 + $0x1a0] sm:$0xff] %v1781
        %1910 = vst [vmem:[%s223 + $0x1a8] sm:$0xff] %v1782
        %1911 = vst [vmem:[%s223 + $0x1b0] sm:$0xff] %v1783
        %1912 = vst [vmem:[%s223 + $0x1b8] sm:$0xff] %v1784
        %1913 = vst [vmem:[%s223 + $0x1c0] sm:$0xff] %v1785
        %1914 = vst [vmem:[%s223 + $0x1c8] sm:$0xff] %v1786
        %1915 = vst [vmem:[%s223 + $0x1d0] sm:$0xff] %v1787
        %1916 = vst [vmem:[%s223 + $0x1d8] sm:$0xff] %v1788
        %1917 = vst [vmem:[%s223 + $0x1e0] sm:$0xff] %v1789
        %1918 = vst [vmem:[%s223 + $0x1e8] sm:$0xff] %v1790
        %1919 = vst [vmem:[%s223 + $0x1f0] sm:$0xff] %v1791
        %1920 = vst [vmem:[%s223 + $0x1f8] sm:$0xff] %v1792
        %1921 = vst [vmem:[%s223 + $0x200] sm:$0xff] %v1793
        %1922 = vst [vmem:[%s223 + $0x208] sm:$0xff] %v1794
        %1923 = vst [vmem:[%s223 + $0x210] sm:$0xff] %v1795
        %1924 = vst [vmem:[%s223 + $0x218] sm:$0xff] %v1796
        %1925 = vst [vmem:[%s223 + $0x220] sm:$0xff] %v1797
        %1926 = vst [vmem:[%s223 + $0x228] sm:$0xff] %v1798
        %1927 = vst [vmem:[%s223 + $0x230] sm:$0xff] %v1799
        %1928 = vst [vmem:[%s223 + $0x238] sm:$0xff] %v1800
        %1929 = vst [vmem:[%s223 + $0x240] sm:$0xff] %v1801
        %1930 = vst [vmem:[%s223 + $0x248] sm:$0xff] %v1802
        %1931 = vst [vmem:[%s223 + $0x250] sm:$0xff] %v1803
        %1932 = vst [vmem:[%s223 + $0x258] sm:$0xff] %v1804
        %1933 = vst [vmem:[%s223 + $0x260] sm:$0xff] %v1805
        %1934 = vst [vmem:[%s223 + $0x268] sm:$0xff] %v1806
        %1935 = vst [vmem:[%s223 + $0x270] sm:$0xff] %v1807
        %1936 = vst [vmem:[%s223 + $0x278] sm:$0xff] %v1808
        %1937 = vst [vmem:[%s223 + $0x280] sm:$0xff] %v1809
        %1938 = vst [vmem:[%s223 + $0x288] sm:$0xff] %v1810
        %1939 = vst [vmem:[%s223 + $0x290] sm:$0xff] %v1811
        %1940 = vst [vmem:[%s223 + $0x298] sm:$0xff] %v1812
        %1941 = vst [vmem:[%s223 + $0x2a0] sm:$0xff] %v1813
        %1942 = vst [vmem:[%s223 + $0x2a8] sm:$0xff] %v1814
        %1943 = vst [vmem:[%s223 + $0x2b0] sm:$0xff] %v1815
        %1944 = vst [vmem:[%s223 + $0x2b8] sm:$0xff] %v1816
        %1945 = vst [vmem:[%s223 + $0x2c0] sm:$0xff] %v1817
        %1946 = vst [vmem:[%s223 + $0x2c8] sm:$0xff] %v1818
        %1947 = vst [vmem:[%s223 + $0x2d0] sm:$0xff] %v1819
        %1948 = vst [vmem:[%s223 + $0x2d8] sm:$0xff] %v1820
        %1949 = vst [vmem:[%s223 + $0x2e0] sm:$0xff] %v1821
        %1950 = vst [vmem:[%s223 + $0x2e8] sm:$0xff] %v1822
        %1951 = vst [vmem:[%s223 + $0x2f0] sm:$0xff] %v1823
        %1952 = vst [vmem:[%s223 + $0x2f8] sm:$0xff] %v1824
        %1953 = vst [vmem:[%s223 + $0x300] sm:$0xff] %v1825
        %1954 = vst [vmem:[%s223 + $0x308] sm:$0xff] %v1826
        %1955 = vst [vmem:[%s223 + $0x310] sm:$0xff] %v1827
        %1956 = vst [vmem:[%s223 + $0x318] sm:$0xff] %v1828
        %1957 = vst [vmem:[%s223 + $0x320] sm:$0xff] %v1829
        %1958 = vst [vmem:[%s223 + $0x328] sm:$0xff] %v1830
        %1959 = vst [vmem:[%s223 + $0x330] sm:$0xff] %v1831
        %1960 = vst [vmem:[%s223 + $0x338] sm:$0xff] %v1832
        %1961 = vst [vmem:[%s223 + $0x340] sm:$0xff] %v1833
        %1962 = vst [vmem:[%s223 + $0x348] sm:$0xff] %v1834
        %1963 = vst [vmem:[%s223 + $0x350] sm:$0xff] %v1835
        %1964 = vst [vmem:[%s223 + $0x358] sm:$0xff] %v1836
        %1965 = vst [vmem:[%s223 + $0x360] sm:$0xff] %v1837
        %1966 = vst [vmem:[%s223 + $0x368] sm:$0xff] %v1838
        %1967 = vst [vmem:[%s223 + $0x370] sm:$0xff] %v1839
        %1968 = vst [vmem:[%s223 + $0x378] sm:$0xff] %v1840
        %1969 = vst [vmem:[%s223 + $0x380] sm:$0xff] %v1841
        %1970 = vst [vmem:[%s223 + $0x388] sm:$0xff] %v1842
        %1971 = vst [vmem:[%s223 + $0x390] sm:$0xff] %v1843
        %1972 = vst [vmem:[%s223 + $0x398] sm:$0xff] %v1844
        %1973 = vst [vmem:[%s223 + $0x3a0] sm:$0xff] %v1845
        %1974 = vst [vmem:[%s223 + $0x3a8] sm:$0xff] %v1846
        %1975 = vst [vmem:[%s223 + $0x3b0] sm:$0xff] %v1847
        %1976 = vst [vmem:[%s223 + $0x3b8] sm:$0xff] %v1848
        %1977 = vst [vmem:[%s223 + $0x3c0] sm:$0xff] %v1849
        %1978 = vst [vmem:[%s223 + $0x3c8] sm:$0xff] %v1850
        %1979 = vst [vmem:[%s223 + $0x3d0] sm:$0xff] %v1851
        %1980 = vst [vmem:[%s223 + $0x3d8] sm:$0xff] %v1852
        %1981 = vst [vmem:[%s223 + $0x3e0] sm:$0xff] %v1853
        %1982 = vst [vmem:[%s223 + $0x3e8] sm:$0xff] %v1854
        %1983 = vst [vmem:[%s223 + $0x3f0] sm:$0xff] %v1855
        %1984 = vst [vmem:[%s223 + $0x3f8] sm:$0xff] %v1856
        %v1985 = vadd.f32 %v1729, %v1730
        %v1986 = vadd.f32 %v1985, %v1731
        %v1987 = vadd.f32 %v1986, %v1732
        %v1988 = vadd.f32 %v1987, %v1733
        %v1989 = vadd.f32 %v1988, %v1734
        %v1990 = vadd.f32 %v1989, %v1735
        %v1991 = vadd.f32 %v1990, %v1736
        %v1992 = vadd.f32 %v1991, %v1737
        %v1993 = vadd.f32 %v1992, %v1738
        %v1994 = vadd.f32 %v1993, %v1739
        %v1995 = vadd.f32 %v1994, %v1740
        %v1996 = vadd.f32 %v1995, %v1741
        %v1997 = vadd.f32 %v1996, %v1742
        %v1998 = vadd.f32 %v1997, %v1743
        %v1999 = vadd.f32 %v1998, %v1744
        %v2000 = vadd.f32 %v1999, %v1745
        %v2001 = vadd.f32 %v2000, %v1746
        %v2002 = vadd.f32 %v2001, %v1747
        %v2003 = vadd.f32 %v2002, %v1748
        %v2004 = vadd.f32 %v2003, %v1749
        %v2005 = vadd.f32 %v2004, %v1750
        %v2006 = vadd.f32 %v2005, %v1751
        %v2007 = vadd.f32 %v2006, %v1752
        %v2008 = vadd.f32 %v2007, %v1753
        %v2009 = vadd.f32 %v2008, %v1754
        %v2010 = vadd.f32 %v2009, %v1755
        %v2011 = vadd.f32 %v2010, %v1756
        %v2012 = vadd.f32 %v2011, %v1757
        %v2013 = vadd.f32 %v2012, %v1758
        %v2014 = vadd.f32 %v2013, %v1759
        %v2015 = vadd.f32 %v2014, %v1760
        %v2016 = vadd.f32 %v2015, %v1761
        %v2017 = vadd.f32 %v2016, %v1762
        %v2018 = vadd.f32 %v2017, %v1763
        %v2019 = vadd.f32 %v2018, %v1764
        %v2020 = vadd.f32 %v2019, %v1765
        %v2021 = vadd.f32 %v2020, %v1766
        %v2022 = vadd.f32 %v2021, %v1767
        %v2023 = vadd.f32 %v2022, %v1768
        %v2024 = vadd.f32 %v2023, %v1769
        %v2025 = vadd.f32 %v2024, %v1770
        %v2026 = vadd.f32 %v2025, %v1771
        %v2027 = vadd.f32 %v2026, %v1772
        %v2028 = vadd.f32 %v2027, %v1773
        %v2029 = vadd.f32 %v2028, %v1774
        %v2030 = vadd.f32 %v2029, %v1775
        %v2031 = vadd.f32 %v2030, %v1776
        %v2032 = vadd.f32 %v2031, %v1777
        %v2033 = vadd.f32 %v2032, %v1778
        %v2034 = vadd.f32 %v2033, %v1779
        %v2035 = vadd.f32 %v2034, %v1780
        %v2036 = vadd.f32 %v2035, %v1781
        %v2037 = vadd.f32 %v2036, %v1782
        %v2038 = vadd.f32 %v2037, %v1783
        %v2039 = vadd.f32 %v2038, %v1784
        %v2040 = vadd.f32 %v2039, %v1785
        %v2041 = vadd.f32 %v2040, %v1786
        %v2042 = vadd.f32 %v2041, %v1787
        %v2043 = vadd.f32 %v2042, %v1788
        %v2044 = vadd.f32 %v2043, %v1789
        %v2045 = vadd.f32 %v2044, %v1790
        %v2046 = vadd.f32 %v2045, %v1791
        %v2047 = vadd.f32 %v2046, %v1792
        %v2048 = vadd.f32 %v2047, %v1793
        %v2049 = vadd.f32 %v2048, %v1794
        %v2050 = vadd.f32 %v2049, %v1795
        %v2051 = vadd.f32 %v2050, %v1796
        %v2052 = vadd.f32 %v2051, %v1797
        %v2053 = vadd.f32 %v2052, %v1798
        %v2054 = vadd.f32 %v2053, %v1799
        %v2055 = vadd.f32 %v2054, %v1800
        %v2056 = vadd.f32 %v2055, %v1801
        %v2057 = vadd.f32 %v2056, %v1802
        %v2058 = vadd.f32 %v2057, %v1803
        %v2059 = vadd.f32 %v2058, %v1804
        %v2060 = vadd.f32 %v2059, %v1805
        %v2061 = vadd.f32 %v2060, %v1806
        %v2062 = vadd.f32 %v2061, %v1807
        %v2063 = vadd.f32 %v2062, %v1808
        %v2064 = vadd.f32 %v2063, %v1809
        %v2065 = vadd.f32 %v2064, %v1810
        %v2066 = vadd.f32 %v2065, %v1811
        %v2067 = vadd.f32 %v2066, %v1812
        %v2068 = vadd.f32 %v2067, %v1813
        %v2069 = vadd.f32 %v2068, %v1814
        %v2070 = vadd.f32 %v2069, %v1815
        %v2071 = vadd.f32 %v2070, %v1816
        %v2072 = vadd.f32 %v2071, %v1817
        %v2073 = vadd.f32 %v2072, %v1818
        %v2074 = vadd.f32 %v2073, %v1819
        %v2075 = vadd.f32 %v2074, %v1820
        %v2076 = vadd.f32 %v2075, %v1821
        %v2077 = vadd.f32 %v2076, %v1822
        %v2078 = vadd.f32 %v2077, %v1823
        %v2079 = vadd.f32 %v2078, %v1824
        %v2080 = vadd.f32 %v2079, %v1825
        %v2081 = vadd.f32 %v2080, %v1826
        %v2082 = vadd.f32 %v2081, %v1827
        %v2083 = vadd.f32 %v2082, %v1828
        %v2084 = vadd.f32 %v2083, %v1829
        %v2085 = vadd.f32 %v2084, %v1830
        %v2086 = vadd.f32 %v2085, %v1831
        %v2087 = vadd.f32 %v2086, %v1832
        %v2088 = vadd.f32 %v2087, %v1833
        %v2089 = vadd.f32 %v2088, %v1834
        %v2090 = vadd.f32 %v2089, %v1835
        %v2091 = vadd.f32 %v2090, %v1836
        %v2092 = vadd.f32 %v2091, %v1837
        %v2093 = vadd.f32 %v2092, %v1838
        %v2094 = vadd.f32 %v2093, %v1839
        %v2095 = vadd.f32 %v2094, %v1840
        %v2096 = vadd.f32 %v2095, %v1841
        %v2097 = vadd.f32 %v2096, %v1842
        %v2098 = vadd.f32 %v2097, %v1843
        %v2099 = vadd.f32 %v2098, %v1844
        %v2100 = vadd.f32 %v2099, %v1845
        %v2101 = vadd.f32 %v2100, %v1846
        %v2102 = vadd.f32 %v2101, %v1847
        %v2103 = vadd.f32 %v2102, %v1848
        %v2104 = vadd.f32 %v2103, %v1849
        %v2105 = vadd.f32 %v2104, %v1850
        %v2106 = vadd.f32 %v2105, %v1851
        %v2107 = vadd.f32 %v2106, %v1852
        %v2108 = vadd.f32 %v2107, %v1853
        %v2109 = vadd.f32 %v2108, %v1854
        %v2110 = vadd.f32 %v2109, %v1855
        %v2111 = vadd.f32 %v2110, %v1856
        %v2112 = vrot.slane %v2111, 4
        %v2113 = vadd.f32 %v2111, %v2112
        %v2114 = vrot.slane %v2113, 2
        %v2115 = vadd.f32 %v2113, %v2114
        %v2116 = vrot.slane %v2115, 1
        %v2117 = vadd.f32 %v2115, %v2116
        %v2118 = vlaneseq
        %v2119 = vshrl.u32 %v2118, 7
        %vm2120 = vcmp.eq.s32.totalorder %v2119, 0
        %v2121 = vsel %vm2120, %v2117, 0.0
        %2122 = vst [vmem:[%s230] sm:$0xff] %v2121
        %s2123 = sand.u32 %s121, 1
        %s2124 = scalar_lea.sflag [#allocation4], %s2123
        %s2125 = sand.u32 %s121, 1
        %s2126 = smul.addr %s2125, 1024
        %s2127 = scalar_lea.vmem [#allocation3], %s2126
        %s2128 = sand.u32 %s147, 1
        %s2129 = scalar_lea.sflag [#allocation6], %s2128
        %s2130 = sand.u32 %s147, 1
        %s2131 = smul.addr %s2130, 8
        %s2132 = scalar_lea.vmem [#allocation5], %s2131
        // Predicated region
        $region37: #{tpu_custom_call.1} parent=35 // pred_check
          %p2133 = pneg %p131
        $region38: #{tpu_custom_call.1} parent=35 // pred_check_branch
          %2135 = sbr.rel (%p2133) target = $region40
        $region39: #{tpu_custom_call.1} parent=35 // pred_region
          %s2136 = smul.u32 128, %s24
          %s2138 = ssub.s32 16384, 16384
          %2139 = vsyncadd %s2124, %s2138
          %s2140 = smul.addr %s2136, 128
          %s2141 = scalar_lea.hbm %s4, %s2140
          %s2142 = sshll.u32 %s2127, 4
          %s2143 = int_to_ptr.vmem [resolvable:$true] %s2142
          %2148 = dma.vmem_to_hbm [thread:$0]  %s2143, 16384, %s2141, %s2124, 128, 128, 8
        $region40: #{tpu_custom_call.1} parent=35 // pred_fallthru
          _
        // Predicated region
        $region41: #{tpu_custom_call.1} parent=35 // pred_check
          %p2149 = pneg %p157
        $region42: #{tpu_custom_call.1} parent=35 // pred_check_branch
          %2151 = sbr.rel (%p2149) target = $region44
        $region43: #{tpu_custom_call.1} parent=35 // pred_region
          %s2153 = ssub.s32 128, 128
          %2154 = vsyncadd %s2129, %s2153
          %s2155 = smul.addr %s24, 128
          %s2156 = scalar_lea.hbm %s5, %s2155
          %s2158 = sshll.u32 %s2132, 4
          %s2159 = int_to_ptr.vmem [resolvable:$true] %s2158
          %2161 = dma.vmem_to_hbm [thread:$0]  %s2159, 128, %s2156, %s2129
        $region44: #{tpu_custom_call.1} parent=35 // pred_fallthru
          _
      $region36: #{tpu_custom_call.1} parent=5 // pred_fallthru
        _
      %p2162 = scmp.le.s32.totalorder 2, %s19
      // Predicated region
      $region45: #{tpu_custom_call.1} parent=5 // pred_check
        %p2163 = pneg %p2162
      $region46: #{tpu_custom_call.1} parent=5 // pred_check_branch
        %2165 = sbr.rel (%p2163) target = $region48
      $region47: #{tpu_custom_call.1} parent=5 // pred_region
        %s2166 = ssub.s32 %s19, 2
        // Predicated region
        $region49: #{tpu_custom_call.1} parent=47 // pred_check
          %p2167 = pneg %p137
        $region50: #{tpu_custom_call.1} parent=47 // pred_check_branch
          %2169 = sbr.rel (%p2167) target = $region52
        $region51: #{tpu_custom_call.1} parent=47 // pred_region
          %s2170 = sand.u32 %s122, 1
          %s2171 = scalar_lea.sflag [#allocation4], %s2170
          %s2172 = sand.u32 %s122, 1
          %s2173 = smul.addr %s2172, 1024
          %s2174 = scalar_lea.vmem [#allocation3], %s2173
          %2175 = dma.done %s2171, 16384
        $region52: #{tpu_custom_call.1} parent=47 // pred_fallthru
          _
        // Predicated region
        $region53: #{tpu_custom_call.1} parent=47 // pred_check
          %p2176 = pneg %p163
        $region54: #{tpu_custom_call.1} parent=47 // pred_check_branch
          %2178 = sbr.rel (%p2176) target = $region56
        $region55: #{tpu_custom_call.1} parent=47 // pred_region
          %s2179 = sand.u32 %s148, 1
          %s2180 = scalar_lea.sflag [#allocation6], %s2179
          %s2181 = sand.u32 %s148, 1
          %s2182 = smul.addr %s2181, 8
          %s2183 = scalar_lea.vmem [#allocation5], %s2182
          %2184 = dma.done %s2180, 128
        $region56: #{tpu_custom_call.1} parent=47 // pred_fallthru
          _
      $region48: #{tpu_custom_call.1} parent=5 // pred_fallthru
        _
    $region6: #{tpu_custom_call.1} parent=1 // loop_footer
      %s23 = sadd.s32 1, %s19
    $region7: #{tpu_custom_call.1} parent=1 // loop_footer_branch
      %18 = sbr.rel target = $region3
    $region8: #{tpu_custom_call.1} parent=1 // loop_exit
      _
    %2185 = vsyncpa [#allocation4], 1
    %s2186 = scalar_lea.sflag [#allocation4], 1
    %2187 = vsyncpa %s2186, 1
    %2188 = vsyncpa [#allocation6], 1
    %s2189 = scalar_lea.sflag [#allocation6], 1
    %2190 = vsyncpa %s2189, 1

</llo_original>
